<compile_context>
chip_gen: v6e
topology: v6e:2x2x1
jax: 0.10.0
libtpu: 0.0.40
codegen_flags: <defaults>
</compile_context>

<pallas_src>
import math

import numpy as np
import jax
import jax.numpy as jnp
from jax import lax
from jax.experimental import pallas as pl
from jax.experimental.pallas import tpu as pltpu


# ----------------------------- small dot helper -------------------------------
def _mm(x, w):
    # x @ w, both operands already oriented (rows, contraction) x (contraction, cols)
    return lax.dot_general(x, w, (((1,), (0,)), ((), ())),
                           preferred_element_type=jnp.float32)


# ------------------------------ fused kernel ----------------------------------
def fused_kernel(x_emb_ref, eps_ref, lens_ref,
                 w3t_ref, b3_ref, w4t_ref, b4_ref, w5t_ref, b5_ref,
                 w6_ref, w6t_ref, b6_ref, w78_ref, b78c_ref,
                 wproj_ref, bias_ref, whht_ref, w2t_ref, b2_ref,
                 out_ref):
    relu = jax.nn.relu
    B, L, E = x_emb_ref.shape
    H = whht_ref.shape[0]
    C = b3_ref.shape[1]
    G = 4 * H

    x_emb = x_emb_ref[...]                          # (B, L, E)
    lens_v = lens_ref[...]                          # (B, 1) int32

    # --------------------------- VAE encoder ----------------------------------
    x_repre = jnp.sum(x_emb, axis=1)                # (B, E)
    lam = relu(_mm(x_repre, w3t_ref[...]) + b3_ref[...])        # fc3 + relu
    pi = relu(_mm(lam, w4t_ref[...]) + b4_ref[...])             # fc4 + relu
    mu_ls = _mm(pi, w5t_ref[...]) + b5_ref[...]                 # merged fc51|fc52, (B, 2C)
    mu = mu_ls[:, :C]
    log_sigma = mu_ls[:, C:]
    sigma = jnp.exp(0.5 * log_sigma)
    h_lat = eps_ref[...] * sigma + mu                           # reparameterize

    # --------------------------- decoder branch --------------------------------
    w6 = w6_ref[...]                                            # fc6.weight, (E, C)
    recon_x = _mm(h_lat, w6t_ref[...]) + b6_ref[...]            # fc6(h_), (B, E)

    # s^T / t^T computed together (fc7/fc8 share the w_phi operand):
    #   [s^T ; t^T] = relu([W7 ; W8] @ w_phi + [b7 ; b8]_col)   -> (2E, C)
    st_all = relu(_mm(w78_ref[...], w6) + b78c_ref[...])
    sT = st_all[:E, :]                                          # (E, C)
    tT = st_all[E:, :]                                          # (E, C)

    # p[b,c] = sum_{l,e} x_emb[b,l,e]*s[c,e] == x_repre @ s^T
    p = _mm(x_repre, sT)                                        # (B, C)
    zeta = 0.8 * p + h_lat
    R = lax.dot_general(zeta, tT, (((1,), (1,)), ((), ())),
                        preferred_element_type=jnp.float32)      # zeta @ t, (B, E)

    # -------- fc1 + LSTM input projection, hoisted out of the recurrence -------
    wproj = wproj_ref[...]                                       # (E, 4H) = W1^T @ W_ih^T
    bias = bias_ref[...]                                         # (1, 4H) folded bias
    gx_emb = _mm(x_emb.reshape(B * L, E), wproj).reshape(B, L, G)
    gx_R = _mm(R, wproj)                                         # appended R timestep

    whh_t = whht_ref[...]                                        # (H, 4H)

    # ---------------- unrolled masked LSTM (pack_padded semantics) -------------
    h = jnp.zeros((B, H), jnp.float32)
    c = jnp.zeros((B, H), jnp.float32)
    for t in range(L + 1):                                       # static -> fully unrolled
        gx_t = gx_emb[:, t, :] if t < L else gx_R
        gates = gx_t + _mm(h, whh_t) + bias                      # (B, 4H), order i,f,g,o
        sig = jax.nn.sigmoid(gates)                              # one full-width pass
        i_g = sig[:, 0:H]
        f_g = sig[:, H:2 * H]
        o_g = sig[:, 3 * H:4 * H]
        g_g = jnp.tanh(gates[:, 2 * H:3 * H])
        c_new = f_g * c + i_g * g_g
        h_new = o_g * jnp.tanh(c_new)
        valid = lens_v > t                                       # (B, 1) packed-seq mask
        h = jnp.where(valid, h_new, h)
        c = jnp.where(valid, c_new, c)

    logits = _mm(h, w2t_ref[...]) + b2_ref[...]                  # weight-norm fc2

    # -------------------- single lane-dense packed output ----------------------
    o1, o2, o3, o4 = E, 2 * E, 2 * E + H, 2 * E + H + C
    used = 2 * E + H + 3 * C
    out_ref[:, 0:o1] = x_repre
    out_ref[:, o1:o2] = recon_x
    out_ref[:, o2:o3] = h                                        # hidden = h[0] (1 layer)
    out_ref[:, o3:o4] = logits
    out_ref[:, o4:used] = mu_ls                                  # [mu | log_sigma]
    if used < out_ref.shape[1]:
        out_ref[:, used:] = jnp.zeros((B, out_ref.shape[1] - used), jnp.float32)


# ------------------------- one-time weight preparation -------------------------
def prepare_params(params):
    """Pre-transpose / pre-fold tiny weights once (outside the per-call path)."""
    hp = lax.Precision.HIGHEST
    E, _ = params["w6"].shape
    prep = {"emb": params["emb"]}
    prep["w3t"], prep["b3"] = params["w3"].T, params["b3"]
    prep["w4t"], prep["b4"] = params["w4"].T, params["b4"]
    prep["w5t"] = jnp.concatenate([params["w51"], params["w52"]], axis=0).T   # (C, 2C)
    prep["b5"] = jnp.concatenate([params["b51"], params["b52"]], axis=1)      # (1, 2C)
    prep["w6"], prep["w6t"], prep["b6"] = params["w6"], params["w6"].T, params["b6"]
    prep["w78"] = jnp.concatenate([params["w7"], params["w8"]], axis=0)       # (2E, E)
    prep["b78c"] = jnp.concatenate([params["b7"], params["b8"]],
                                   axis=1).reshape(2 * E, 1)                  # (2E, 1)
    # fc1 and the LSTM input projection compose into one linear map:
    prep["wproj"] = jnp.matmul(params["w1"].T, params["w_ih"].T, precision=hp)  # (E, 4H)
    prep["bias"] = (jnp.matmul(params["b1"], params["w_ih"].T, precision=hp)
                    + params["b_ih"] + params["b_hh"])                          # (1, 4H)
    prep["whht"] = params["w_hh"].T                                             # (H, 4H)
    v, g = params["w2_v"], params["w2_g"]
    w2 = g * v / jnp.linalg.norm(v, axis=1, keepdims=True)                      # weight_norm
    prep["w2t"], prep["b2"] = w2.T, params["b2"]
    return prep


# --------------------------------- wrapper -------------------------------------
def model_forward(prep, x, x_lens, eps):
    x_emb = prep["emb"][x].astype(jnp.float32)        # embedding gather (XLA glue)
    # TODO(synk): training-mode GaussianNoise / Dropout not implemented (eval = identity).
    B, L, E = x_emb.shape
    C = prep["b3"].shape[1]
    H = prep["whht"].shape[0]
    used = 2 * E + H + 3 * C
    P = ((used + 127) // 128) * 128                   # lane-dense packed output width
    lens2d = x_lens.reshape(B, 1).astype(jnp.int32)

    vmem = pl.BlockSpec(memory_space=pltpu.MemorySpace.VMEM)
    packed = pl.pallas_call(
        fused_kernel,
        out_shape=jax.ShapeDtypeStruct((B, P), jnp.float32),
        in_specs=[vmem] * 19,
        out_specs=vmem,
        # NOTE: for larger batches on v7x, add grid=(B//bb,) over batch with
        # dimension_semantics=("parallel",) to use both TensorCores.
    )(x_emb, eps, lens2d,
      prep["w3t"], prep["b3"], prep["w4t"], prep["b4"], prep["w5t"], prep["b5"],
      prep["w6"], prep["w6t"], prep["b6"], prep["w78"], prep["b78c"],
      prep["wproj"], prep["bias"], prep["whht"], prep["w2t"], prep["b2"])

    x_repre = packed[:, 0:E]
    recon_x = packed[:, E:2 * E]
    hidden = packed[:, 2 * E:2 * E + H]
    logits = packed[:, 2 * E + H:2 * E + H + C]
    mu = packed[:, 2 * E + H + C:2 * E + H + 2 * C]
    log_sigma = packed[:, 2 * E + H + 2 * C:2 * E + H + 3 * C]
    return logits, hidden, x_repre, recon_x, mu, log_sigma


# ----------------------------- pure-JAX reference ------------------------------
def reference_forward(params, x, x_lens, eps):
    relu = jax.nn.relu
    x_emb = params["emb"][x]
    B, L, E = x_emb.shape
    x_repre = x_emb.sum(1)
    lam = relu(x_repre @ params["w3"].T + params["b3"])
    pi = relu(lam @ params["w4"].T + params["b4"])
    mu = pi @ params["w51"].T + params["b51"]
    log_sigma = pi @ params["w52"].T + params["b52"]
    sigma = jnp.exp(0.5 * log_sigma)
    h_ = eps * sigma + mu
    recon_x = h_ @ params["w6"].T + params["b6"]
    wphiT = params["w6"].T
    s = relu(wphiT @ params["w7"].T + params["b7"])
    t = relu(wphiT @ params["w8"].T + params["b8"])
    p = (x_emb.reshape(-1, E) @ s.T).reshape(B, L, -1).transpose(0, 2, 1).sum(-1)
    zeta = 0.8 * p + h_
    R = zeta @ t
    x_new = jnp.concatenate([x_emb, R[:, None, :]], axis=1)
    h1 = x_new @ params["w1"].T + params["b1"]

    wih, whh = params["w_ih"], params["w_hh"]
    bias = params["b_ih"] + params["b_hh"]
    H = whh.shape[1]

    def step(carry, inp):
        h, c = carry
        xt, tt = inp
        gates = xt @ wih.T + h @ whh.T + bias
        i = jax.nn.sigmoid(gates[:, :H])
        f = jax.nn.sigmoid(gates[:, H:2 * H])
        g = jnp.tanh(gates[:, 2 * H:3 * H])
        o = jax.nn.sigmoid(gates[:, 3 * H:])
        c_new = f * c + i * g
        h_new = o * jnp.tanh(c_new)
        mask = (tt < x_lens)[:, None]
        return (jnp.where(mask, h_new, h), jnp.where(mask, c_new, c)), None

    h0 = jnp.zeros((B, H), jnp.float32)
    c0 = jnp.zeros((B, H), jnp.float32)
    (hf, _), _ = lax.scan(step, (h0, c0),
                          (jnp.transpose(h1, (1, 0, 2)), jnp.arange(L + 1)))
    hidden = hf
    v, g = params["w2_v"], params["w2_g"]
    w2 = g * v / jnp.linalg.norm(v, axis=1, keepdims=True)
    logits = hidden @ w2.T + params["b2"]
    return logits, hidden, x_repre, recon_x, mu, log_sigma


# ----------------------------------- params ------------------------------------
def init_params(key, vocab, E, H, C):
    keys = jax.random.split(key, 16)

    def lin(k, out_d, in_d):
        k1, k2 = jax.random.split(k)
        bound = 1.0 / math.sqrt(in_d)
        w = jax.random.uniform(k1, (out_d, in_d), jnp.float32, -bound, bound)
        b = jax.random.uniform(k2, (1, out_d), jnp.float32, -bound, bound)
        return w, b

    p = {}
    p["emb"] = jax.random.normal(keys[0], (vocab, E), jnp.float32) * 0.1
    p["w1"], p["b1"] = lin(keys[1], H, E)
    p["w3"], p["b3"] = lin(keys[2], C, E)
    p["w4"], p["b4"] = lin(keys[3], C, C)
    p["w51"], p["b51"] = lin(keys[4], C, C)
    p["w52"], p["b52"] = lin(keys[5], C, C)
    p["w6"], p["b6"] = lin(keys[6], E, C)
    p["w7"], p["b7"] = lin(keys[7], E, E)
    p["w8"], p["b8"] = lin(keys[8], E, E)
    kb = 1.0 / math.sqrt(H)
    p["w_ih"] = jax.random.uniform(keys[9], (4 * H, H), jnp.float32, -kb, kb)
    p["w_hh"] = jax.random.uniform(keys[10], (4 * H, H), jnp.float32, -kb, kb)
    p["b_ih"] = jax.random.uniform(keys[11], (1, 4 * H), jnp.float32, -kb, kb)
    p["b_hh"] = jax.random.uniform(keys[12], (1, 4 * H), jnp.float32, -kb, kb)
    v = jax.random.uniform(keys[13], (C, H), jnp.float32, -kb, kb)
    p["w2_v"] = v
    p["w2_g"] = jnp.linalg.norm(v, axis=1, keepdims=True)   # PyTorch weight_norm init
    _, p["b2"] = lin(keys[14], C, H)
    return p


if __name__ == "__main__":
    B, L = 2, 8
    VOCAB, E, H, C = 50, 32, 32, 8      # emb_dim, hidden_dim, num_classes (num_layers=1)

    key = jax.random.PRNGKey(0)
    kp, kx, ke = jax.random.split(key, 3)
    params = init_params(kp, VOCAB, E, H, C)

    x = jax.random.randint(kx, (B, L), 0, VOCAB, dtype=jnp.int32)
    x_lens = jnp.array([8, 5], dtype=jnp.int32)            # sorted descending (pack_padded)
    eps = jax.random.normal(ke, (B, C), jnp.float32)       # reparameterization noise

    prep = prepare_params(params)                          # one-time weight folding
    fwd = jax.jit(model_forward)

    outs = fwd(prep, x, x_lens, eps)
    outs = jax.block_until_ready(outs)

    refs = jax.block_until_ready(reference_forward(params, x, x_lens, eps))
    for o, r in zip(outs, refs):
        np.testing.assert_allclose(np.asarray(o), np.asarray(r), rtol=3e-3, atol=3e-3)

    print("KERNEL_OK")
</pallas_src>

<mosaic_0001>
module attributes {stable_mosaic.version = 11 : i64} {
  func.func @fused_kernel(%arg0: memref<2x8x32xf32, #tpu.memory_space<vmem>>, %arg1: memref<2x8xf32, #tpu.memory_space<vmem>>, %arg2: memref<2x1xi32, #tpu.memory_space<vmem>>, %arg3: memref<32x8xf32, #tpu.memory_space<vmem>>, %arg4: memref<1x8xf32, #tpu.memory_space<vmem>>, %arg5: memref<8x8xf32, #tpu.memory_space<vmem>>, %arg6: memref<1x8xf32, #tpu.memory_space<vmem>>, %arg7: memref<8x16xf32, #tpu.memory_space<vmem>>, %arg8: memref<1x16xf32, #tpu.memory_space<vmem>>, %arg9: memref<32x8xf32, #tpu.memory_space<vmem>>, %arg10: memref<8x32xf32, #tpu.memory_space<vmem>>, %arg11: memref<1x32xf32, #tpu.memory_space<vmem>>, %arg12: memref<64x32xf32, #tpu.memory_space<vmem>>, %arg13: memref<64x1xf32, #tpu.memory_space<vmem>>, %arg14: memref<32x128xf32, #tpu.memory_space<vmem>>, %arg15: memref<1x128xf32, #tpu.memory_space<vmem>>, %arg16: memref<32x128xf32, #tpu.memory_space<vmem>>, %arg17: memref<32x8xf32, #tpu.memory_space<vmem>>, %arg18: memref<1x8xf32, #tpu.memory_space<vmem>>, %arg19: memref<2x128xf32, #tpu.memory_space<vmem>>) attributes {dimension_semantics = [], scalar_prefetch = 0 : i64, scratch_operands = 0 : i64, tpu.core_type = #tpu.core_type<tc>} {
    %c0 = arith.constant 0 : index
    %c0_0 = arith.constant 0 : index
    %c0_1 = arith.constant 0 : index
    %0 = vector.load %arg0[%c0, %c0_0, %c0_1] : memref<2x8x32xf32, #tpu.memory_space<vmem>>, vector<2x8x32xf32>
    %c0_2 = arith.constant 0 : index
    %c0_3 = arith.constant 0 : index
    %1 = vector.load %arg2[%c0_2, %c0_3] : memref<2x1xi32, #tpu.memory_space<vmem>>, vector<2x1xi32>
    %cst = arith.constant dense<0.000000e+00> : vector<2x32xf32>
    %2 = vector.multi_reduction <add>, %0, %cst [1] : vector<2x8x32xf32> to vector<2x32xf32>
    %c0_4 = arith.constant 0 : index
    %c0_5 = arith.constant 0 : index
    %3 = vector.load %arg3[%c0_4, %c0_5] : memref<32x8xf32, #tpu.memory_space<vmem>>, vector<32x8xf32>
    %cst_6 = arith.constant dense<0.000000e+00> : vector<2x8xf32>
    %4 = tpu.matmul %2, %3, %cst_6 {dimension_numbers = #tpu.dot_dimension_numbers<[1], [0], [0], [1], [0, 0, 1, 1], [], []>} : vector<2x32xf32>, vector<32x8xf32>, vector<2x8xf32> -> vector<2x8xf32>
    %c0_7 = arith.constant 0 : index
    %c0_8 = arith.constant 0 : index
    %5 = vector.load %arg4[%c0_7, %c0_8] : memref<1x8xf32, #tpu.memory_space<vmem>>, vector<1x8xf32>
    %6 = vector.broadcast %5 : vector<1x8xf32> to vector<2x8xf32>
    %7 = arith.addf %4, %6 : vector<2x8xf32>
    %cst_9 = arith.constant 0.000000e+00 : f32
    %8 = vector.broadcast %cst_9 : f32 to vector<2x8xf32>
    %9 = arith.maximumf %7, %8 : vector<2x8xf32>
    %c0_10 = arith.constant 0 : index
    %c0_11 = arith.constant 0 : index
    %10 = vector.load %arg5[%c0_10, %c0_11] : memref<8x8xf32, #tpu.memory_space<vmem>>, vector<8x8xf32>
    %cst_12 = arith.constant dense<0.000000e+00> : vector<2x8xf32>
    %11 = tpu.matmul %9, %10, %cst_12 {dimension_numbers = #tpu.dot_dimension_numbers<[1], [0], [0], [1], [0, 0, 1, 1], [], []>} : vector<2x8xf32>, vector<8x8xf32>, vector<2x8xf32> -> vector<2x8xf32>
    %c0_13 = arith.constant 0 : index
    %c0_14 = arith.constant 0 : index
    %12 = vector.load %arg6[%c0_13, %c0_14] : memref<1x8xf32, #tpu.memory_space<vmem>>, vector<1x8xf32>
    %13 = vector.broadcast %12 : vector<1x8xf32> to vector<2x8xf32>
    %14 = arith.addf %11, %13 : vector<2x8xf32>
    %cst_15 = arith.constant 0.000000e+00 : f32
    %15 = vector.broadcast %cst_15 : f32 to vector<2x8xf32>
    %16 = arith.maximumf %14, %15 : vector<2x8xf32>
    %c0_16 = arith.constant 0 : index
    %c0_17 = arith.constant 0 : index
    %17 = vector.load %arg7[%c0_16, %c0_17] : memref<8x16xf32, #tpu.memory_space<vmem>>, vector<8x16xf32>
    %cst_18 = arith.constant dense<0.000000e+00> : vector<2x16xf32>
    %18 = tpu.matmul %16, %17, %cst_18 {dimension_numbers = #tpu.dot_dimension_numbers<[1], [0], [0], [1], [0, 0, 1, 1], [], []>} : vector<2x8xf32>, vector<8x16xf32>, vector<2x16xf32> -> vector<2x16xf32>
    %c0_19 = arith.constant 0 : index
    %c0_20 = arith.constant 0 : index
    %19 = vector.load %arg8[%c0_19, %c0_20] : memref<1x16xf32, #tpu.memory_space<vmem>>, vector<1x16xf32>
    %20 = vector.broadcast %19 : vector<1x16xf32> to vector<2x16xf32>
    %21 = arith.addf %18, %20 : vector<2x16xf32>
    %22 = vector.extract_strided_slice %21 {offsets = [0, 0], sizes = [2, 8], strides = [1, 1]} : vector<2x16xf32> to vector<2x8xf32>
    %23 = vector.extract_strided_slice %21 {offsets = [0, 8], sizes = [2, 8], strides = [1, 1]} : vector<2x16xf32> to vector<2x8xf32>
    %cst_21 = arith.constant 5.000000e-01 : f32
    %24 = vector.broadcast %cst_21 : f32 to vector<2x8xf32>
    %25 = arith.mulf %24, %23 : vector<2x8xf32>
    %26 = math.exp %25 : vector<2x8xf32>
    %c0_22 = arith.constant 0 : index
    %c0_23 = arith.constant 0 : index
    %27 = vector.load %arg1[%c0_22, %c0_23] : memref<2x8xf32, #tpu.memory_space<vmem>>, vector<2x8xf32>
    %28 = arith.mulf %27, %26 : vector<2x8xf32>
    %29 = arith.addf %28, %22 : vector<2x8xf32>
    %c0_24 = arith.constant 0 : index
    %c0_25 = arith.constant 0 : index
    %30 = vector.load %arg9[%c0_24, %c0_25] : memref<32x8xf32, #tpu.memory_space<vmem>>, vector<32x8xf32>
    %c0_26 = arith.constant 0 : index
    %c0_27 = arith.constant 0 : index
    %31 = vector.load %arg10[%c0_26, %c0_27] : memref<8x32xf32, #tpu.memory_space<vmem>>, vector<8x32xf32>
    %cst_28 = arith.constant dense<0.000000e+00> : vector<2x32xf32>
    %32 = tpu.matmul %29, %31, %cst_28 {dimension_numbers = #tpu.dot_dimension_numbers<[1], [0], [0], [1], [0, 0, 1, 1], [], []>} : vector<2x8xf32>, vector<8x32xf32>, vector<2x32xf32> -> vector<2x32xf32>
    %c0_29 = arith.constant 0 : index
    %c0_30 = arith.constant 0 : index
    %33 = vector.load %arg11[%c0_29, %c0_30] : memref<1x32xf32, #tpu.memory_space<vmem>>, vector<1x32xf32>
    %34 = vector.broadcast %33 : vector<1x32xf32> to vector<2x32xf32>
    %35 = arith.addf %32, %34 : vector<2x32xf32>
    %c0_31 = arith.constant 0 : index
    %c0_32 = arith.constant 0 : index
    %36 = vector.load %arg12[%c0_31, %c0_32] : memref<64x32xf32, #tpu.memory_space<vmem>>, vector<64x32xf32>
    %cst_33 = arith.constant dense<0.000000e+00> : vector<64x8xf32>
    %37 = tpu.matmul %36, %30, %cst_33 {dimension_numbers = #tpu.dot_dimension_numbers<[1], [0], [0], [1], [0, 0, 1, 1], [], []>} : vector<64x32xf32>, vector<32x8xf32>, vector<64x8xf32> -> vector<64x8xf32>
    %c0_34 = arith.constant 0 : index
    %c0_35 = arith.constant 0 : index
    %38 = vector.load %arg13[%c0_34, %c0_35] : memref<64x1xf32, #tpu.memory_space<vmem>>, vector<64x1xf32>
    %39 = vector.broadcast %38 : vector<64x1xf32> to vector<64x8xf32>
    %40 = arith.addf %37, %39 : vector<64x8xf32>
    %cst_36 = arith.constant 0.000000e+00 : f32
    %41 = vector.broadcast %cst_36 : f32 to vector<64x8xf32>
    %42 = arith.maximumf %40, %41 : vector<64x8xf32>
    %43 = vector.extract_strided_slice %42 {offsets = [0, 0], sizes = [32, 8], strides = [1, 1]} : vector<64x8xf32> to vector<32x8xf32>
    %44 = vector.extract_strided_slice %42 {offsets = [32, 0], sizes = [32, 8], strides = [1, 1]} : vector<64x8xf32> to vector<32x8xf32>
    %cst_37 = arith.constant dense<0.000000e+00> : vector<2x8xf32>
    %45 = tpu.matmul %2, %43, %cst_37 {dimension_numbers = #tpu.dot_dimension_numbers<[1], [0], [0], [1], [0, 0, 1, 1], [], []>} : vector<2x32xf32>, vector<32x8xf32>, vector<2x8xf32> -> vector<2x8xf32>
    %cst_38 = arith.constant 8.000000e-01 : f32
    %46 = vector.broadcast %cst_38 : f32 to vector<2x8xf32>
    %47 = arith.mulf %46, %45 : vector<2x8xf32>
    %48 = arith.addf %47, %29 : vector<2x8xf32>
    %cst_39 = arith.constant dense<0.000000e+00> : vector<2x32xf32>
    %49 = tpu.matmul %48, %44, %cst_39 {dimension_numbers = #tpu.dot_dimension_numbers<[1], [1], [0], [0], [0, 0, 1, 0], [], []>} : vector<2x8xf32>, vector<32x8xf32>, vector<2x32xf32> -> vector<2x32xf32>
    %c0_40 = arith.constant 0 : index
    %c0_41 = arith.constant 0 : index
    %50 = vector.load %arg14[%c0_40, %c0_41] : memref<32x128xf32, #tpu.memory_space<vmem>>, vector<32x128xf32>
    %c0_42 = arith.constant 0 : index
    %c0_43 = arith.constant 0 : index
    %51 = vector.load %arg15[%c0_42, %c0_43] : memref<1x128xf32, #tpu.memory_space<vmem>>, vector<1x128xf32>
    %52 = vector.shape_cast %0 : vector<2x8x32xf32> to vector<16x32xf32>
    %cst_44 = arith.constant dense<0.000000e+00> : vector<16x128xf32>
    %53 = tpu.matmul %52, %50, %cst_44 {dimension_numbers = #tpu.dot_dimension_numbers<[1], [0], [0], [1], [0, 0, 1, 1], [], []>} : vector<16x32xf32>, vector<32x128xf32>, vector<16x128xf32> -> vector<16x128xf32>
    %54 = vector.shape_cast %53 : vector<16x128xf32> to vector<2x8x128xf32>
    %cst_45 = arith.constant dense<0.000000e+00> : vector<2x128xf32>
    %55 = tpu.matmul %49, %50, %cst_45 {dimension_numbers = #tpu.dot_dimension_numbers<[1], [0], [0], [1], [0, 0, 1, 1], [], []>} : vector<2x32xf32>, vector<32x128xf32>, vector<2x128xf32> -> vector<2x128xf32>
    %c0_46 = arith.constant 0 : index
    %c0_47 = arith.constant 0 : index
    %56 = vector.load %arg16[%c0_46, %c0_47] : memref<32x128xf32, #tpu.memory_space<vmem>>, vector<32x128xf32>
    %cst_48 = arith.constant 0.000000e+00 : f32
    %57 = vector.broadcast %cst_48 : f32 to vector<2x32xf32>
    %cst_49 = arith.constant 0.000000e+00 : f32
    %58 = vector.broadcast %cst_49 : f32 to vector<2x32xf32>
    %59 = vector.extract_strided_slice %54 {offsets = [0, 0, 0], sizes = [2, 1, 128], strides = [1, 1, 1]} : vector<2x8x128xf32> to vector<2x1x128xf32>
    %60 = vector.shape_cast %59 : vector<2x1x128xf32> to vector<2x128xf32>
    %cst_50 = arith.constant dense<0.000000e+00> : vector<2x128xf32>
    %61 = tpu.matmul %57, %56, %cst_50 {dimension_numbers = #tpu.dot_dimension_numbers<[1], [0], [0], [1], [0, 0, 1, 1], [], []>} : vector<2x32xf32>, vector<32x128xf32>, vector<2x128xf32> -> vector<2x128xf32>
    %62 = arith.addf %60, %61 : vector<2x128xf32>
    %63 = vector.broadcast %51 : vector<1x128xf32> to vector<2x128xf32>
    %64 = arith.addf %62, %63 : vector<2x128xf32>
    %65 = arith.negf %64 : vector<2x128xf32>
    %66 = math.exp %65 : vector<2x128xf32>
    %cst_51 = arith.constant 1.000000e+00 : f32
    %67 = vector.broadcast %cst_51 : f32 to vector<2x128xf32>
    %68 = arith.addf %67, %66 : vector<2x128xf32>
    %69 = arith.divf %67, %68 : vector<2x128xf32>
    %70 = vector.extract_strided_slice %69 {offsets = [0, 0], sizes = [2, 32], strides = [1, 1]} : vector<2x128xf32> to vector<2x32xf32>
    %71 = vector.extract_strided_slice %69 {offsets = [0, 32], sizes = [2, 32], strides = [1, 1]} : vector<2x128xf32> to vector<2x32xf32>
    %72 = vector.extract_strided_slice %69 {offsets = [0, 96], sizes = [2, 32], strides = [1, 1]} : vector<2x128xf32> to vector<2x32xf32>
    %73 = vector.extract_strided_slice %64 {offsets = [0, 64], sizes = [2, 32], strides = [1, 1]} : vector<2x128xf32> to vector<2x32xf32>
    %74 = math.tanh %73 : vector<2x32xf32>
    %75 = arith.mulf %71, %58 : vector<2x32xf32>
    %76 = arith.mulf %70, %74 : vector<2x32xf32>
    %77 = arith.addf %75, %76 : vector<2x32xf32>
    %78 = math.tanh %77 : vector<2x32xf32>
    %79 = arith.mulf %72, %78 : vector<2x32xf32>
    %c0_i32 = arith.constant 0 : i32
    %80 = vector.broadcast %c0_i32 : i32 to vector<2x1xi32>
    %81 = arith.cmpi sgt, %1, %80 : vector<2x1xi32>
    %82 = vector.shape_cast %81 : vector<2x1xi1> to vector<2x1xi1>
    %83 = vector.broadcast %82 : vector<2x1xi1> to vector<2x32xi1>
    %84 = arith.select %83, %79, %57 : vector<2x32xi1>, vector<2x32xf32>
    %85 = vector.shape_cast %81 : vector<2x1xi1> to vector<2x1xi1>
    %86 = vector.broadcast %85 : vector<2x1xi1> to vector<2x32xi1>
    %87 = arith.select %86, %77, %58 : vector<2x32xi1>, vector<2x32xf32>
    %88 = vector.extract_strided_slice %54 {offsets = [0, 1, 0], sizes = [2, 1, 128], strides = [1, 1, 1]} : vector<2x8x128xf32> to vector<2x1x128xf32>
    %89 = vector.shape_cast %88 : vector<2x1x128xf32> to vector<2x128xf32>
    %cst_52 = arith.constant dense<0.000000e+00> : vector<2x128xf32>
    %90 = tpu.matmul %84, %56, %cst_52 {dimension_numbers = #tpu.dot_dimension_numbers<[1], [0], [0], [1], [0, 0, 1, 1], [], []>} : vector<2x32xf32>, vector<32x128xf32>, vector<2x128xf32> -> vector<2x128xf32>
    %91 = arith.addf %89, %90 : vector<2x128xf32>
    %92 = vector.broadcast %51 : vector<1x128xf32> to vector<2x128xf32>
    %93 = arith.addf %91, %92 : vector<2x128xf32>
    %94 = arith.negf %93 : vector<2x128xf32>
    %95 = math.exp %94 : vector<2x128xf32>
    %cst_53 = arith.constant 1.000000e+00 : f32
    %96 = vector.broadcast %cst_53 : f32 to vector<2x128xf32>
    %97 = arith.addf %96, %95 : vector<2x128xf32>
    %98 = arith.divf %96, %97 : vector<2x128xf32>
    %99 = vector.extract_strided_slice %98 {offsets = [0, 0], sizes = [2, 32], strides = [1, 1]} : vector<2x128xf32> to vector<2x32xf32>
    %100 = vector.extract_strided_slice %98 {offsets = [0, 32], sizes = [2, 32], strides = [1, 1]} : vector<2x128xf32> to vector<2x32xf32>
    %101 = vector.extract_strided_slice %98 {offsets = [0, 96], sizes = [2, 32], strides = [1, 1]} : vector<2x128xf32> to vector<2x32xf32>
    %102 = vector.extract_strided_slice %93 {offsets = [0, 64], sizes = [2, 32], strides = [1, 1]} : vector<2x128xf32> to vector<2x32xf32>
    %103 = math.tanh %102 : vector<2x32xf32>
    %104 = arith.mulf %100, %87 : vector<2x32xf32>
    %105 = arith.mulf %99, %103 : vector<2x32xf32>
    %106 = arith.addf %104, %105 : vector<2x32xf32>
    %107 = math.tanh %106 : vector<2x32xf32>
    %108 = arith.mulf %101, %107 : vector<2x32xf32>
    %c1_i32 = arith.constant 1 : i32
    %109 = vector.broadcast %c1_i32 : i32 to vector<2x1xi32>
    %110 = arith.cmpi sgt, %1, %109 : vector<2x1xi32>
    %111 = vector.shape_cast %110 : vector<2x1xi1> to vector<2x1xi1>
    %112 = vector.broadcast %111 : vector<2x1xi1> to vector<2x32xi1>
    %113 = arith.select %112, %108, %84 : vector<2x32xi1>, vector<2x32xf32>
    %114 = vector.shape_cast %110 : vector<2x1xi1> to vector<2x1xi1>
    %115 = vector.broadcast %114 : vector<2x1xi1> to vector<2x32xi1>
    %116 = arith.select %115, %106, %87 : vector<2x32xi1>, vector<2x32xf32>
    %117 = vector.extract_strided_slice %54 {offsets = [0, 2, 0], sizes = [2, 1, 128], strides = [1, 1, 1]} : vector<2x8x128xf32> to vector<2x1x128xf32>
    %118 = vector.shape_cast %117 : vector<2x1x128xf32> to vector<2x128xf32>
    %cst_54 = arith.constant dense<0.000000e+00> : vector<2x128xf32>
    %119 = tpu.matmul %113, %56, %cst_54 {dimension_numbers = #tpu.dot_dimension_numbers<[1], [0], [0], [1], [0, 0, 1, 1], [], []>} : vector<2x32xf32>, vector<32x128xf32>, vector<2x128xf32> -> vector<2x128xf32>
    %120 = arith.addf %118, %119 : vector<2x128xf32>
    %121 = vector.broadcast %51 : vector<1x128xf32> to vector<2x128xf32>
    %122 = arith.addf %120, %121 : vector<2x128xf32>
    %123 = arith.negf %122 : vector<2x128xf32>
    %124 = math.exp %123 : vector<2x128xf32>
    %cst_55 = arith.constant 1.000000e+00 : f32
    %125 = vector.broadcast %cst_55 : f32 to vector<2x128xf32>
    %126 = arith.addf %125, %124 : vector<2x128xf32>
    %127 = arith.divf %125, %126 : vector<2x128xf32>
    %128 = vector.extract_strided_slice %127 {offsets = [0, 0], sizes = [2, 32], strides = [1, 1]} : vector<2x128xf32> to vector<2x32xf32>
    %129 = vector.extract_strided_slice %127 {offsets = [0, 32], sizes = [2, 32], strides = [1, 1]} : vector<2x128xf32> to vector<2x32xf32>
    %130 = vector.extract_strided_slice %127 {offsets = [0, 96], sizes = [2, 32], strides = [1, 1]} : vector<2x128xf32> to vector<2x32xf32>
    %131 = vector.extract_strided_slice %122 {offsets = [0, 64], sizes = [2, 32], strides = [1, 1]} : vector<2x128xf32> to vector<2x32xf32>
    %132 = math.tanh %131 : vector<2x32xf32>
    %133 = arith.mulf %129, %116 : vector<2x32xf32>
    %134 = arith.mulf %128, %132 : vector<2x32xf32>
    %135 = arith.addf %133, %134 : vector<2x32xf32>
    %136 = math.tanh %135 : vector<2x32xf32>
    %137 = arith.mulf %130, %136 : vector<2x32xf32>
    %c2_i32 = arith.constant 2 : i32
    %138 = vector.broadcast %c2_i32 : i32 to vector<2x1xi32>
    %139 = arith.cmpi sgt, %1, %138 : vector<2x1xi32>
    %140 = vector.shape_cast %139 : vector<2x1xi1> to vector<2x1xi1>
    %141 = vector.broadcast %140 : vector<2x1xi1> to vector<2x32xi1>
    %142 = arith.select %141, %137, %113 : vector<2x32xi1>, vector<2x32xf32>
    %143 = vector.shape_cast %139 : vector<2x1xi1> to vector<2x1xi1>
    %144 = vector.broadcast %143 : vector<2x1xi1> to vector<2x32xi1>
    %145 = arith.select %144, %135, %116 : vector<2x32xi1>, vector<2x32xf32>
    %146 = vector.extract_strided_slice %54 {offsets = [0, 3, 0], sizes = [2, 1, 128], strides = [1, 1, 1]} : vector<2x8x128xf32> to vector<2x1x128xf32>
    %147 = vector.shape_cast %146 : vector<2x1x128xf32> to vector<2x128xf32>
    %cst_56 = arith.constant dense<0.000000e+00> : vector<2x128xf32>
    %148 = tpu.matmul %142, %56, %cst_56 {dimension_numbers = #tpu.dot_dimension_numbers<[1], [0], [0], [1], [0, 0, 1, 1], [], []>} : vector<2x32xf32>, vector<32x128xf32>, vector<2x128xf32> -> vector<2x128xf32>
    %149 = arith.addf %147, %148 : vector<2x128xf32>
    %150 = vector.broadcast %51 : vector<1x128xf32> to vector<2x128xf32>
    %151 = arith.addf %149, %150 : vector<2x128xf32>
    %152 = arith.negf %151 : vector<2x128xf32>
    %153 = math.exp %152 : vector<2x128xf32>
    %cst_57 = arith.constant 1.000000e+00 : f32
    %154 = vector.broadcast %cst_57 : f32 to vector<2x128xf32>
    %155 = arith.addf %154, %153 : vector<2x128xf32>
    %156 = arith.divf %154, %155 : vector<2x128xf32>
    %157 = vector.extract_strided_slice %156 {offsets = [0, 0], sizes = [2, 32], strides = [1, 1]} : vector<2x128xf32> to vector<2x32xf32>
    %158 = vector.extract_strided_slice %156 {offsets = [0, 32], sizes = [2, 32], strides = [1, 1]} : vector<2x128xf32> to vector<2x32xf32>
    %159 = vector.extract_strided_slice %156 {offsets = [0, 96], sizes = [2, 32], strides = [1, 1]} : vector<2x128xf32> to vector<2x32xf32>
    %160 = vector.extract_strided_slice %151 {offsets = [0, 64], sizes = [2, 32], strides = [1, 1]} : vector<2x128xf32> to vector<2x32xf32>
    %161 = math.tanh %160 : vector<2x32xf32>
    %162 = arith.mulf %158, %145 : vector<2x32xf32>
    %163 = arith.mulf %157, %161 : vector<2x32xf32>
    %164 = arith.addf %162, %163 : vector<2x32xf32>
    %165 = math.tanh %164 : vector<2x32xf32>
    %166 = arith.mulf %159, %165 : vector<2x32xf32>
    %c3_i32 = arith.constant 3 : i32
    %167 = vector.broadcast %c3_i32 : i32 to vector<2x1xi32>
    %168 = arith.cmpi sgt, %1, %167 : vector<2x1xi32>
    %169 = vector.shape_cast %168 : vector<2x1xi1> to vector<2x1xi1>
    %170 = vector.broadcast %169 : vector<2x1xi1> to vector<2x32xi1>
    %171 = arith.select %170, %166, %142 : vector<2x32xi1>, vector<2x32xf32>
    %172 = vector.shape_cast %168 : vector<2x1xi1> to vector<2x1xi1>
    %173 = vector.broadcast %172 : vector<2x1xi1> to vector<2x32xi1>
    %174 = arith.select %173, %164, %145 : vector<2x32xi1>, vector<2x32xf32>
    %175 = vector.extract_strided_slice %54 {offsets = [0, 4, 0], sizes = [2, 1, 128], strides = [1, 1, 1]} : vector<2x8x128xf32> to vector<2x1x128xf32>
    %176 = vector.shape_cast %175 : vector<2x1x128xf32> to vector<2x128xf32>
    %cst_58 = arith.constant dense<0.000000e+00> : vector<2x128xf32>
    %177 = tpu.matmul %171, %56, %cst_58 {dimension_numbers = #tpu.dot_dimension_numbers<[1], [0], [0], [1], [0, 0, 1, 1], [], []>} : vector<2x32xf32>, vector<32x128xf32>, vector<2x128xf32> -> vector<2x128xf32>
    %178 = arith.addf %176, %177 : vector<2x128xf32>
    %179 = vector.broadcast %51 : vector<1x128xf32> to vector<2x128xf32>
    %180 = arith.addf %178, %179 : vector<2x128xf32>
    %181 = arith.negf %180 : vector<2x128xf32>
    %182 = math.exp %181 : vector<2x128xf32>
    %cst_59 = arith.constant 1.000000e+00 : f32
    %183 = vector.broadcast %cst_59 : f32 to vector<2x128xf32>
    %184 = arith.addf %183, %182 : vector<2x128xf32>
    %185 = arith.divf %183, %184 : vector<2x128xf32>
    %186 = vector.extract_strided_slice %185 {offsets = [0, 0], sizes = [2, 32], strides = [1, 1]} : vector<2x128xf32> to vector<2x32xf32>
    %187 = vector.extract_strided_slice %185 {offsets = [0, 32], sizes = [2, 32], strides = [1, 1]} : vector<2x128xf32> to vector<2x32xf32>
    %188 = vector.extract_strided_slice %185 {offsets = [0, 96], sizes = [2, 32], strides = [1, 1]} : vector<2x128xf32> to vector<2x32xf32>
    %189 = vector.extract_strided_slice %180 {offsets = [0, 64], sizes = [2, 32], strides = [1, 1]} : vector<2x128xf32> to vector<2x32xf32>
    %190 = math.tanh %189 : vector<2x32xf32>
    %191 = arith.mulf %187, %174 : vector<2x32xf32>
    %192 = arith.mulf %186, %190 : vector<2x32xf32>
    %193 = arith.addf %191, %192 : vector<2x32xf32>
    %194 = math.tanh %193 : vector<2x32xf32>
    %195 = arith.mulf %188, %194 : vector<2x32xf32>
    %c4_i32 = arith.constant 4 : i32
    %196 = vector.broadcast %c4_i32 : i32 to vector<2x1xi32>
    %197 = arith.cmpi sgt, %1, %196 : vector<2x1xi32>
    %198 = vector.shape_cast %197 : vector<2x1xi1> to vector<2x1xi1>
    %199 = vector.broadcast %198 : vector<2x1xi1> to vector<2x32xi1>
    %200 = arith.select %199, %195, %171 : vector<2x32xi1>, vector<2x32xf32>
    %201 = vector.shape_cast %197 : vector<2x1xi1> to vector<2x1xi1>
    %202 = vector.broadcast %201 : vector<2x1xi1> to vector<2x32xi1>
    %203 = arith.select %202, %193, %174 : vector<2x32xi1>, vector<2x32xf32>
    %204 = vector.extract_strided_slice %54 {offsets = [0, 5, 0], sizes = [2, 1, 128], strides = [1, 1, 1]} : vector<2x8x128xf32> to vector<2x1x128xf32>
    %205 = vector.shape_cast %204 : vector<2x1x128xf32> to vector<2x128xf32>
    %cst_60 = arith.constant dense<0.000000e+00> : vector<2x128xf32>
    %206 = tpu.matmul %200, %56, %cst_60 {dimension_numbers = #tpu.dot_dimension_numbers<[1], [0], [0], [1], [0, 0, 1, 1], [], []>} : vector<2x32xf32>, vector<32x128xf32>, vector<2x128xf32> -> vector<2x128xf32>
    %207 = arith.addf %205, %206 : vector<2x128xf32>
    %208 = vector.broadcast %51 : vector<1x128xf32> to vector<2x128xf32>
    %209 = arith.addf %207, %208 : vector<2x128xf32>
    %210 = arith.negf %209 : vector<2x128xf32>
    %211 = math.exp %210 : vector<2x128xf32>
    %cst_61 = arith.constant 1.000000e+00 : f32
    %212 = vector.broadcast %cst_61 : f32 to vector<2x128xf32>
    %213 = arith.addf %212, %211 : vector<2x128xf32>
    %214 = arith.divf %212, %213 : vector<2x128xf32>
    %215 = vector.extract_strided_slice %214 {offsets = [0, 0], sizes = [2, 32], strides = [1, 1]} : vector<2x128xf32> to vector<2x32xf32>
    %216 = vector.extract_strided_slice %214 {offsets = [0, 32], sizes = [2, 32], strides = [1, 1]} : vector<2x128xf32> to vector<2x32xf32>
    %217 = vector.extract_strided_slice %214 {offsets = [0, 96], sizes = [2, 32], strides = [1, 1]} : vector<2x128xf32> to vector<2x32xf32>
    %218 = vector.extract_strided_slice %209 {offsets = [0, 64], sizes = [2, 32], strides = [1, 1]} : vector<2x128xf32> to vector<2x32xf32>
    %219 = math.tanh %218 : vector<2x32xf32>
    %220 = arith.mulf %216, %203 : vector<2x32xf32>
    %221 = arith.mulf %215, %219 : vector<2x32xf32>
    %222 = arith.addf %220, %221 : vector<2x32xf32>
    %223 = math.tanh %222 : vector<2x32xf32>
    %224 = arith.mulf %217, %223 : vector<2x32xf32>
    %c5_i32 = arith.constant 5 : i32
    %225 = vector.broadcast %c5_i32 : i32 to vector<2x1xi32>
    %226 = arith.cmpi sgt, %1, %225 : vector<2x1xi32>
    %227 = vector.shape_cast %226 : vector<2x1xi1> to vector<2x1xi1>
    %228 = vector.broadcast %227 : vector<2x1xi1> to vector<2x32xi1>
    %229 = arith.select %228, %224, %200 : vector<2x32xi1>, vector<2x32xf32>
    %230 = vector.shape_cast %226 : vector<2x1xi1> to vector<2x1xi1>
    %231 = vector.broadcast %230 : vector<2x1xi1> to vector<2x32xi1>
    %232 = arith.select %231, %222, %203 : vector<2x32xi1>, vector<2x32xf32>
    %233 = vector.extract_strided_slice %54 {offsets = [0, 6, 0], sizes = [2, 1, 128], strides = [1, 1, 1]} : vector<2x8x128xf32> to vector<2x1x128xf32>
    %234 = vector.shape_cast %233 : vector<2x1x128xf32> to vector<2x128xf32>
    %cst_62 = arith.constant dense<0.000000e+00> : vector<2x128xf32>
    %235 = tpu.matmul %229, %56, %cst_62 {dimension_numbers = #tpu.dot_dimension_numbers<[1], [0], [0], [1], [0, 0, 1, 1], [], []>} : vector<2x32xf32>, vector<32x128xf32>, vector<2x128xf32> -> vector<2x128xf32>
    %236 = arith.addf %234, %235 : vector<2x128xf32>
    %237 = vector.broadcast %51 : vector<1x128xf32> to vector<2x128xf32>
    %238 = arith.addf %236, %237 : vector<2x128xf32>
    %239 = arith.negf %238 : vector<2x128xf32>
    %240 = math.exp %239 : vector<2x128xf32>
    %cst_63 = arith.constant 1.000000e+00 : f32
    %241 = vector.broadcast %cst_63 : f32 to vector<2x128xf32>
    %242 = arith.addf %241, %240 : vector<2x128xf32>
    %243 = arith.divf %241, %242 : vector<2x128xf32>
    %244 = vector.extract_strided_slice %243 {offsets = [0, 0], sizes = [2, 32], strides = [1, 1]} : vector<2x128xf32> to vector<2x32xf32>
    %245 = vector.extract_strided_slice %243 {offsets = [0, 32], sizes = [2, 32], strides = [1, 1]} : vector<2x128xf32> to vector<2x32xf32>
    %246 = vector.extract_strided_slice %243 {offsets = [0, 96], sizes = [2, 32], strides = [1, 1]} : vector<2x128xf32> to vector<2x32xf32>
    %247 = vector.extract_strided_slice %238 {offsets = [0, 64], sizes = [2, 32], strides = [1, 1]} : vector<2x128xf32> to vector<2x32xf32>
    %248 = math.tanh %247 : vector<2x32xf32>
    %249 = arith.mulf %245, %232 : vector<2x32xf32>
    %250 = arith.mulf %244, %248 : vector<2x32xf32>
    %251 = arith.addf %249, %250 : vector<2x32xf32>
    %252 = math.tanh %251 : vector<2x32xf32>
    %253 = arith.mulf %246, %252 : vector<2x32xf32>
    %c6_i32 = arith.constant 6 : i32
    %254 = vector.broadcast %c6_i32 : i32 to vector<2x1xi32>
    %255 = arith.cmpi sgt, %1, %254 : vector<2x1xi32>
    %256 = vector.shape_cast %255 : vector<2x1xi1> to vector<2x1xi1>
    %257 = vector.broadcast %256 : vector<2x1xi1> to vector<2x32xi1>
    %258 = arith.select %257, %253, %229 : vector<2x32xi1>, vector<2x32xf32>
    %259 = vector.shape_cast %255 : vector<2x1xi1> to vector<2x1xi1>
    %260 = vector.broadcast %259 : vector<2x1xi1> to vector<2x32xi1>
    %261 = arith.select %260, %251, %232 : vector<2x32xi1>, vector<2x32xf32>
    %262 = vector.extract_strided_slice %54 {offsets = [0, 7, 0], sizes = [2, 1, 128], strides = [1, 1, 1]} : vector<2x8x128xf32> to vector<2x1x128xf32>
    %263 = vector.shape_cast %262 : vector<2x1x128xf32> to vector<2x128xf32>
    %cst_64 = arith.constant dense<0.000000e+00> : vector<2x128xf32>
    %264 = tpu.matmul %258, %56, %cst_64 {dimension_numbers = #tpu.dot_dimension_numbers<[1], [0], [0], [1], [0, 0, 1, 1], [], []>} : vector<2x32xf32>, vector<32x128xf32>, vector<2x128xf32> -> vector<2x128xf32>
    %265 = arith.addf %263, %264 : vector<2x128xf32>
    %266 = vector.broadcast %51 : vector<1x128xf32> to vector<2x128xf32>
    %267 = arith.addf %265, %266 : vector<2x128xf32>
    %268 = arith.negf %267 : vector<2x128xf32>
    %269 = math.exp %268 : vector<2x128xf32>
    %cst_65 = arith.constant 1.000000e+00 : f32
    %270 = vector.broadcast %cst_65 : f32 to vector<2x128xf32>
    %271 = arith.addf %270, %269 : vector<2x128xf32>
    %272 = arith.divf %270, %271 : vector<2x128xf32>
    %273 = vector.extract_strided_slice %272 {offsets = [0, 0], sizes = [2, 32], strides = [1, 1]} : vector<2x128xf32> to vector<2x32xf32>
    %274 = vector.extract_strided_slice %272 {offsets = [0, 32], sizes = [2, 32], strides = [1, 1]} : vector<2x128xf32> to vector<2x32xf32>
    %275 = vector.extract_strided_slice %272 {offsets = [0, 96], sizes = [2, 32], strides = [1, 1]} : vector<2x128xf32> to vector<2x32xf32>
    %276 = vector.extract_strided_slice %267 {offsets = [0, 64], sizes = [2, 32], strides = [1, 1]} : vector<2x128xf32> to vector<2x32xf32>
    %277 = math.tanh %276 : vector<2x32xf32>
    %278 = arith.mulf %274, %261 : vector<2x32xf32>
    %279 = arith.mulf %273, %277 : vector<2x32xf32>
    %280 = arith.addf %278, %279 : vector<2x32xf32>
    %281 = math.tanh %280 : vector<2x32xf32>
    %282 = arith.mulf %275, %281 : vector<2x32xf32>
    %c7_i32 = arith.constant 7 : i32
    %283 = vector.broadcast %c7_i32 : i32 to vector<2x1xi32>
    %284 = arith.cmpi sgt, %1, %283 : vector<2x1xi32>
    %285 = vector.shape_cast %284 : vector<2x1xi1> to vector<2x1xi1>
    %286 = vector.broadcast %285 : vector<2x1xi1> to vector<2x32xi1>
    %287 = arith.select %286, %282, %258 : vector<2x32xi1>, vector<2x32xf32>
    %288 = vector.shape_cast %284 : vector<2x1xi1> to vector<2x1xi1>
    %289 = vector.broadcast %288 : vector<2x1xi1> to vector<2x32xi1>
    %290 = arith.select %289, %280, %261 : vector<2x32xi1>, vector<2x32xf32>
    %cst_66 = arith.constant dense<0.000000e+00> : vector<2x128xf32>
    %291 = tpu.matmul %287, %56, %cst_66 {dimension_numbers = #tpu.dot_dimension_numbers<[1], [0], [0], [1], [0, 0, 1, 1], [], []>} : vector<2x32xf32>, vector<32x128xf32>, vector<2x128xf32> -> vector<2x128xf32>
    %292 = arith.addf %55, %291 : vector<2x128xf32>
    %293 = vector.broadcast %51 : vector<1x128xf32> to vector<2x128xf32>
    %294 = arith.addf %292, %293 : vector<2x128xf32>
    %295 = arith.negf %294 : vector<2x128xf32>
    %296 = math.exp %295 : vector<2x128xf32>
    %cst_67 = arith.constant 1.000000e+00 : f32
    %297 = vector.broadcast %cst_67 : f32 to vector<2x128xf32>
    %298 = arith.addf %297, %296 : vector<2x128xf32>
    %299 = arith.divf %297, %298 : vector<2x128xf32>
    %300 = vector.extract_strided_slice %299 {offsets = [0, 0], sizes = [2, 32], strides = [1, 1]} : vector<2x128xf32> to vector<2x32xf32>
    %301 = vector.extract_strided_slice %299 {offsets = [0, 32], sizes = [2, 32], strides = [1, 1]} : vector<2x128xf32> to vector<2x32xf32>
    %302 = vector.extract_strided_slice %299 {offsets = [0, 96], sizes = [2, 32], strides = [1, 1]} : vector<2x128xf32> to vector<2x32xf32>
    %303 = vector.extract_strided_slice %294 {offsets = [0, 64], sizes = [2, 32], strides = [1, 1]} : vector<2x128xf32> to vector<2x32xf32>
    %304 = math.tanh %303 : vector<2x32xf32>
    %305 = arith.mulf %301, %290 : vector<2x32xf32>
    %306 = arith.mulf %300, %304 : vector<2x32xf32>
    %307 = arith.addf %305, %306 : vector<2x32xf32>
    %308 = math.tanh %307 : vector<2x32xf32>
    %309 = arith.mulf %302, %308 : vector<2x32xf32>
    %c8_i32 = arith.constant 8 : i32
    %310 = vector.broadcast %c8_i32 : i32 to vector<2x1xi32>
    %311 = arith.cmpi sgt, %1, %310 : vector<2x1xi32>
    %312 = vector.shape_cast %311 : vector<2x1xi1> to vector<2x1xi1>
    %313 = vector.broadcast %312 : vector<2x1xi1> to vector<2x32xi1>
    %314 = arith.select %313, %309, %287 : vector<2x32xi1>, vector<2x32xf32>
    %c0_68 = arith.constant 0 : index
    %c0_69 = arith.constant 0 : index
    %315 = vector.load %arg17[%c0_68, %c0_69] : memref<32x8xf32, #tpu.memory_space<vmem>>, vector<32x8xf32>
    %cst_70 = arith.constant dense<0.000000e+00> : vector<2x8xf32>
    %316 = tpu.matmul %314, %315, %cst_70 {dimension_numbers = #tpu.dot_dimension_numbers<[1], [0], [0], [1], [0, 0, 1, 1], [], []>} : vector<2x32xf32>, vector<32x8xf32>, vector<2x8xf32> -> vector<2x8xf32>
    %c0_71 = arith.constant 0 : index
    %c0_72 = arith.constant 0 : index
    %317 = vector.load %arg18[%c0_71, %c0_72] : memref<1x8xf32, #tpu.memory_space<vmem>>, vector<1x8xf32>
    %318 = vector.broadcast %317 : vector<1x8xf32> to vector<2x8xf32>
    %319 = arith.addf %316, %318 : vector<2x8xf32>
    %c0_73 = arith.constant 0 : index
    %c0_74 = arith.constant 0 : index
    %320 = vector.load %arg19[%c0_73, %c0_74] : memref<2x128xf32, #tpu.memory_space<vmem>>, vector<2x32xf32>
    tpu.vector_store %arg19[%c0_73, %c0_74], %2 {strides = array<i32>} : memref<2x128xf32, #tpu.memory_space<vmem>>, vector<2x32xf32>,
    %c0_75 = arith.constant 0 : index
    %c32 = arith.constant 32 : index
    %321 = vector.load %arg19[%c0_75, %c32] : memref<2x128xf32, #tpu.memory_space<vmem>>, vector<2x32xf32>
    tpu.vector_store %arg19[%c0_75, %c32], %35 {strides = array<i32>} : memref<2x128xf32, #tpu.memory_space<vmem>>, vector<2x32xf32>,
    %c0_76 = arith.constant 0 : index
    %c64 = arith.constant 64 : index
    %322 = vector.load %arg19[%c0_76, %c64] : memref<2x128xf32, #tpu.memory_space<vmem>>, vector<2x32xf32>
    tpu.vector_store %arg19[%c0_76, %c64], %314 {strides = array<i32>} : memref<2x128xf32, #tpu.memory_space<vmem>>, vector<2x32xf32>,
    %c0_77 = arith.constant 0 : index
    %c96 = arith.constant 96 : index
    %323 = vector.load %arg19[%c0_77, %c96] : memref<2x128xf32, #tpu.memory_space<vmem>>, vector<2x8xf32>
    tpu.vector_store %arg19[%c0_77, %c96], %319 {strides = array<i32>} : memref<2x128xf32, #tpu.memory_space<vmem>>, vector<2x8xf32>,
    %c0_78 = arith.constant 0 : index
    %c104 = arith.constant 104 : index
    %324 = vector.load %arg19[%c0_78, %c104] : memref<2x128xf32, #tpu.memory_space<vmem>>, vector<2x16xf32>
    tpu.vector_store %arg19[%c0_78, %c104], %21 {strides = array<i32>} : memref<2x128xf32, #tpu.memory_space<vmem>>, vector<2x16xf32>,
    %cst_79 = arith.constant 0.000000e+00 : f32
    %325 = vector.broadcast %cst_79 : f32 to vector<2x8xf32>
    %c0_80 = arith.constant 0 : index
    %c120 = arith.constant 120 : index
    %326 = vector.load %arg19[%c0_80, %c120] : memref<2x128xf32, #tpu.memory_space<vmem>>, vector<2x8xf32>
    tpu.vector_store %arg19[%c0_80, %c120], %325 {strides = array<i32>} : memref<2x128xf32, #tpu.memory_space<vmem>>, vector<2x8xf32>,
    return
  }
}

</mosaic_0001>

<llo_original>
// kernel: model_forward.1
$region0: #{model_forward.1}
  #allocation0 [shape = 'u32[]', space=smem, size = 0x4, offset = 0x4, fixed_abs, tag = 'smem constant byte address 0x4 - core index']
  #allocation1 [shape = 'u32[144,128]{1,0:T(1,128)}', space=vmem, size = 0x12000, scoped, tag = 'internal scratch']
  %s0 = inlined_call_operand.vmem [shape: f32[2,8,32], index: 0, kind: input, shape index: {}]
  %s1 = inlined_call_operand.vmem [shape: f32[2,8], index: 1, kind: input, shape index: {}]
  %s2 = inlined_call_operand.vmem [shape: s32[2,1], index: 2, kind: input, shape index: {}]
  %s3 = inlined_call_operand.vmem [shape: f32[32,8], index: 3, kind: input, shape index: {}]
  %s4 = inlined_call_operand.vmem [shape: f32[1,8], index: 4, kind: input, shape index: {}]
  %s5 = inlined_call_operand.vmem [shape: f32[8,8], index: 5, kind: input, shape index: {}]
  %s6 = inlined_call_operand.vmem [shape: f32[1,8], index: 6, kind: input, shape index: {}]
  %s7 = inlined_call_operand.vmem [shape: f32[8,16], index: 7, kind: input, shape index: {}]
  %s8 = inlined_call_operand.vmem [shape: f32[1,16], index: 8, kind: input, shape index: {}]
  %s9 = inlined_call_operand.vmem [shape: f32[32,8], index: 9, kind: input, shape index: {}]
  %s10 = inlined_call_operand.vmem [shape: f32[8,32], index: 10, kind: input, shape index: {}]
  %s11 = inlined_call_operand.vmem [shape: f32[1,32], index: 11, kind: input, shape index: {}]
  %s12 = inlined_call_operand.vmem [shape: f32[64,32], index: 12, kind: input, shape index: {}]
  %s13 = inlined_call_operand.vmem [shape: f32[64,1], index: 13, kind: input, shape index: {}]
  %s14 = inlined_call_operand.vmem [shape: f32[32,128], index: 14, kind: input, shape index: {}]
  %s15 = inlined_call_operand.vmem [shape: f32[1,128], index: 15, kind: input, shape index: {}]
  %s16 = inlined_call_operand.vmem [shape: f32[32,128], index: 16, kind: input, shape index: {}]
  %s17 = inlined_call_operand.vmem [shape: f32[32,8], index: 17, kind: input, shape index: {}]
  %s18 = inlined_call_operand.vmem [shape: f32[1,8], index: 18, kind: input, shape index: {}]
  %s19 = inlined_call_operand.vmem [shape: f32[2,128], index: 19, kind: output, shape index: {}]
  %s20 = sld [smem:[#allocation0]]
  $region86: #{model_forward.1} parent=0
    _
  %s22 = ssub.s32 1, %s20
  %s23 = scalar_select 0, %s22, %s20
  // Predicated region
  $region2: #{model_forward.1} parent=0 // pred_check
    _
  $region3: #{model_forward.1} parent=0 // pred_check_branch
    %25 = sbr.rel (0) target = $region5
  $region4: #{model_forward.1} parent=0 // pred_region
    _
  $region5: #{model_forward.1} parent=0 // pred_fallthru
    _
  // Predicated region
  $region6: #{model_forward.1} parent=0 // pred_check
    _
  $region7: #{model_forward.1} parent=0 // pred_check_branch
    %27 = sbr.rel (0) target = $region9
  $region8: #{model_forward.1} parent=0 // pred_region
    _
  $region9: #{model_forward.1} parent=0 // pred_fallthru
    _
  // Predicated region
  $region10: #{model_forward.1} parent=0 // pred_check
    _
  $region11: #{model_forward.1} parent=0 // pred_check_branch
    %29 = sbr.rel (0) target = $region13
  $region12: #{model_forward.1} parent=0 // pred_region
    _
  $region13: #{model_forward.1} parent=0 // pred_fallthru
    _
  // Predicated region
  $region14: #{model_forward.1} parent=0 // pred_check
    _
  $region15: #{model_forward.1} parent=0 // pred_check_branch
    %31 = sbr.rel (0) target = $region17
  $region16: #{model_forward.1} parent=0 // pred_region
    _
  $region17: #{model_forward.1} parent=0 // pred_fallthru
    _
  // Predicated region
  $region18: #{model_forward.1} parent=0 // pred_check
    _
  $region19: #{model_forward.1} parent=0 // pred_check_branch
    %33 = sbr.rel (0) target = $region21
  $region20: #{model_forward.1} parent=0 // pred_region
    _
  $region21: #{model_forward.1} parent=0 // pred_fallthru
    _
  // Predicated region
  $region22: #{model_forward.1} parent=0 // pred_check
    _
  $region23: #{model_forward.1} parent=0 // pred_check_branch
    %35 = sbr.rel (0) target = $region25
  $region24: #{model_forward.1} parent=0 // pred_region
    _
  $region25: #{model_forward.1} parent=0 // pred_fallthru
    _
  // Predicated region
  $region26: #{model_forward.1} parent=0 // pred_check
    _
  $region27: #{model_forward.1} parent=0 // pred_check_branch
    %37 = sbr.rel (0) target = $region29
  $region28: #{model_forward.1} parent=0 // pred_region
    _
  $region29: #{model_forward.1} parent=0 // pred_fallthru
    _
  // Predicated region
  $region30: #{model_forward.1} parent=0 // pred_check
    _
  $region31: #{model_forward.1} parent=0 // pred_check_branch
    %39 = sbr.rel (0) target = $region33
  $region32: #{model_forward.1} parent=0 // pred_region
    _
  $region33: #{model_forward.1} parent=0 // pred_fallthru
    _
  // Predicated region
  $region34: #{model_forward.1} parent=0 // pred_check
    _
  $region35: #{model_forward.1} parent=0 // pred_check_branch
    %41 = sbr.rel (0) target = $region37
  $region36: #{model_forward.1} parent=0 // pred_region
    _
  $region37: #{model_forward.1} parent=0 // pred_fallthru
    _
  // Predicated region
  $region38: #{model_forward.1} parent=0 // pred_check
    _
  $region39: #{model_forward.1} parent=0 // pred_check_branch
    %43 = sbr.rel (0) target = $region41
  $region40: #{model_forward.1} parent=0 // pred_region
    _
  $region41: #{model_forward.1} parent=0 // pred_fallthru
    _
  // Predicated region
  $region42: #{model_forward.1} parent=0 // pred_check
    _
  $region43: #{model_forward.1} parent=0 // pred_check_branch
    %45 = sbr.rel (0) target = $region45
  $region44: #{model_forward.1} parent=0 // pred_region
    _
  $region45: #{model_forward.1} parent=0 // pred_fallthru
    _
  // Predicated region
  $region46: #{model_forward.1} parent=0 // pred_check
    _
  $region47: #{model_forward.1} parent=0 // pred_check_branch
    %47 = sbr.rel (0) target = $region49
  $region48: #{model_forward.1} parent=0 // pred_region
    _
  $region49: #{model_forward.1} parent=0 // pred_fallthru
    _
  // Predicated region
  $region50: #{model_forward.1} parent=0 // pred_check
    _
  $region51: #{model_forward.1} parent=0 // pred_check_branch
    %49 = sbr.rel (0) target = $region53
  $region52: #{model_forward.1} parent=0 // pred_region
    _
  $region53: #{model_forward.1} parent=0 // pred_fallthru
    _
  // Predicated region
  $region54: #{model_forward.1} parent=0 // pred_check
    _
  $region55: #{model_forward.1} parent=0 // pred_check_branch
    %51 = sbr.rel (0) target = $region57
  $region56: #{model_forward.1} parent=0 // pred_region
    _
  $region57: #{model_forward.1} parent=0 // pred_fallthru
    _
  // Predicated region
  $region58: #{model_forward.1} parent=0 // pred_check
    _
  $region59: #{model_forward.1} parent=0 // pred_check_branch
    %53 = sbr.rel (0) target = $region61
  $region60: #{model_forward.1} parent=0 // pred_region
    _
  $region61: #{model_forward.1} parent=0 // pred_fallthru
    _
  // Predicated region
  $region62: #{model_forward.1} parent=0 // pred_check
    _
  $region63: #{model_forward.1} parent=0 // pred_check_branch
    %55 = sbr.rel (0) target = $region65
  $region64: #{model_forward.1} parent=0 // pred_region
    _
  $region65: #{model_forward.1} parent=0 // pred_fallthru
    _
  // Predicated region
  $region66: #{model_forward.1} parent=0 // pred_check
    _
  $region67: #{model_forward.1} parent=0 // pred_check_branch
    %57 = sbr.rel (0) target = $region69
  $region68: #{model_forward.1} parent=0 // pred_region
    _
  $region69: #{model_forward.1} parent=0 // pred_fallthru
    _
  // Predicated region
  $region70: #{model_forward.1} parent=0 // pred_check
    _
  $region71: #{model_forward.1} parent=0 // pred_check_branch
    %59 = sbr.rel (0) target = $region73
  $region72: #{model_forward.1} parent=0 // pred_region
    _
  $region73: #{model_forward.1} parent=0 // pred_fallthru
    _
  // Predicated region
  $region74: #{model_forward.1} parent=0 // pred_check
    _
  $region75: #{model_forward.1} parent=0 // pred_check_branch
    %61 = sbr.rel (0) target = $region77
  $region76: #{model_forward.1} parent=0 // pred_region
    _
  $region77: #{model_forward.1} parent=0 // pred_fallthru
    _
  %v62 = vld [vmem:[%s0] sm:$0xff]
  %v63 = vld [vmem:[%s0 + $0x8] sm:$0xff]
  %v64 = vld [vmem:[%s2] sm:$0x3]
  %vm65 = vcmask 261120
  %v66 = vsel %vm65, %v62, 0.0
  %v67 = vrot.slane %v66, 4
  %v68 = vadd.f32 %v66, %v67
  %v69 = vrot.slane %v68, 2
  %v70 = vadd.f32 %v68, %v69
  %v71 = vrot.slane %v70, 1
  %v72 = vadd.f32 %v70, %v71
  %v73 = vsel %vm65, %v63, 0.0
  %v74 = vrot.slane %v73, 4
  %v75 = vadd.f32 %v73, %v74
  %v76 = vrot.slane %v75, 2
  %v77 = vadd.f32 %v75, %v76
  %v78 = vrot.slane %v77, 1
  %v79 = vadd.f32 %v77, %v78
  %v80 = vld [vmem:[%s3] sm:$0xff]
  %v81 = vld [vmem:[%s3 + $0x8] sm:$0xff]
  %v82 = vld [vmem:[%s3 + $0x10] sm:$0xff]
  %v83 = vld [vmem:[%s3 + $0x18] sm:$0xff]
  %v84 = vld [vmem:[%s4] sm:$0x1]
  %v86 = vlaneseq
  %v87 = vshrl.u32 %v86, 7
  %v88 = vsub.s32 0, %v87
  %v89 = vrot.slane %v84, %v88
  %vm93 = vcmask 1041409
  %v94 = vsel %vm93, %v79, %v72
  %v95 = vsel %vm65, %v94, 0
  %97 = vmatprep.subr.mxu0 0.0
  %98 = vmatpush1.msra.mxu0 0.0
  %99 = vmatprep.subr.mxu0 0.0
  %100 = vmatpush1.msra.mxu0 0.0
  %101 = vmatprep.subr.mxu0 0.0
  %102 = vmatpush1.msra.mxu0 0.0
  %103 = vmatprep.subr.mxu0 0.0
  %104 = vmatpush1.msra.mxu0 0.0
  %105 = vmatprep.subr.mxu0 0.0
  %106 = vmatpush1.msra.mxu0 0.0
  %107 = vmatprep.subr.mxu0 0.0
  %108 = vmatpush1.msra.mxu0 0.0
  %109 = vmatprep.subr.mxu0 0.0
  %110 = vmatpush1.msra.mxu0 0.0
  %111 = vmatprep.subr.mxu0 0.0
  %112 = vmatpush1.msra.mxu0 0.0
  %113 = vmatprep.subr.mxu0 0.0
  %114 = vmatpush1.msra.mxu0 0.0
  %115 = vmatprep.subr.mxu0 0.0
  %116 = vmatpush1.msra.mxu0 0.0
  %117 = vmatprep.subr.mxu0 0.0
  %118 = vmatpush1.msra.mxu0 0.0
  %119 = vmatprep.subr.mxu0 0.0
  %120 = vmatpush1.msra.mxu0 0.0
  %121 = vmatprep.subr.mxu0 0.0
  %122 = vmatpush1.msra.mxu0 %v83
  %123 = vmatprep.subr.mxu0 0.0
  %124 = vmatpush1.msra.mxu0 %v82
  %125 = vmatprep.subr.mxu0 0.0
  %126 = vmatpush1.msra.mxu0 %v81
  %127 = vmatprep.subr.mxu0 0.0
  %128 = vmatpush1.msra.mxu0 %v80
  %129 = vmatprep.subr.mxu0 0.0
  %130 = vmatpush2.msra.mxu0 0.0
  %131 = vmatprep.subr.mxu0 0.0
  %132 = vmatpush2.msra.mxu0 0.0
  %133 = vmatprep.subr.mxu0 0.0
  %134 = vmatpush2.msra.mxu0 0.0
  %135 = vmatprep.subr.mxu0 0.0
  %136 = vmatpush2.msra.mxu0 0.0
  %137 = vmatprep.subr.mxu0 0.0
  %138 = vmatpush2.msra.mxu0 0.0
  %139 = vmatprep.subr.mxu0 0.0
  %140 = vmatpush2.msra.mxu0 0.0
  %141 = vmatprep.subr.mxu0 0.0
  %142 = vmatpush2.msra.mxu0 0.0
  %143 = vmatprep.subr.mxu0 0.0
  %144 = vmatpush2.msra.mxu0 0.0
  %145 = vmatprep.subr.mxu0 0.0
  %146 = vmatpush2.msra.mxu0 0.0
  %147 = vmatprep.subr.mxu0 0.0
  %148 = vmatpush2.msra.mxu0 0.0
  %149 = vmatprep.subr.mxu0 0.0
  %150 = vmatpush2.msra.mxu0 0.0
  %151 = vmatprep.subr.mxu0 0.0
  %152 = vmatpush2.msra.mxu0 0.0
  %153 = vmatprep.subr.mxu0 0.0
  %154 = vmatpush2.msra.mxu0 0.0
  %155 = vmatprep.subr.mxu0 0.0
  %156 = vmatpush2.msra.mxu0 0.0
  %157 = vmatprep.subr.mxu0 0.0
  %158 = vmatpush2.msra.mxu0 0.0
  %159 = vmatprep.subr.mxu0 0.0
  %160 = vmatpush2.msra.mxu0 0.0
  %161 = vmatprep.mubr.f32.mxu0 0.0
  %162 = vmatmul.mubr.f32.gmra.mxu0 %v95
  %v163 = vpop.f32.mrf.mxu0
  %v164 = vadd.f32 %v89, %v163
  %v165 = vpop.f32.mrf.mxu0
  %166 = vdwg.mxu0
  %v167 = vmax.f32 %v164, 0.0
  %v168 = vld [vmem:[%s5] sm:$0xff]
  %v169 = vld [vmem:[%s6] sm:$0x1]
  %v171 = vlaneseq
  %v172 = vshrl.u32 %v171, 7
  %v173 = vsub.s32 0, %v172
  %v174 = vrot.slane %v169, %v173
  %vm176 = vcmask 64512
  %v178 = vsel %vm176, %v167, 0
  %180 = vmatprep.subr.mxu0 0.0
  %181 = vmatpush1.msra.mxu0 0.0
  %182 = vmatprep.subr.mxu0 0.0
  %183 = vmatpush1.msra.mxu0 0.0
  %184 = vmatprep.subr.mxu0 0.0
  %185 = vmatpush1.msra.mxu0 0.0
  %186 = vmatprep.subr.mxu0 0.0
  %187 = vmatpush1.msra.mxu0 0.0
  %188 = vmatprep.subr.mxu0 0.0
  %189 = vmatpush1.msra.mxu0 0.0
  %190 = vmatprep.subr.mxu0 0.0
  %191 = vmatpush1.msra.mxu0 0.0
  %192 = vmatprep.subr.mxu0 0.0
  %193 = vmatpush1.msra.mxu0 0.0
  %194 = vmatprep.subr.mxu0 0.0
  %195 = vmatpush1.msra.mxu0 0.0
  %196 = vmatprep.subr.mxu0 0.0
  %197 = vmatpush1.msra.mxu0 0.0
  %198 = vmatprep.subr.mxu0 0.0
  %199 = vmatpush1.msra.mxu0 0.0
  %200 = vmatprep.subr.mxu0 0.0
  %201 = vmatpush1.msra.mxu0 0.0
  %202 = vmatprep.subr.mxu0 0.0
  %203 = vmatpush1.msra.mxu0 0.0
  %204 = vmatprep.subr.mxu0 0.0
  %205 = vmatpush1.msra.mxu0 0.0
  %206 = vmatprep.subr.mxu0 0.0
  %207 = vmatpush1.msra.mxu0 0.0
  %208 = vmatprep.subr.mxu0 0.0
  %209 = vmatpush1.msra.mxu0 0.0
  %210 = vmatprep.subr.mxu0 0.0
  %211 = vmatpush1.msra.mxu0 %v168
  %212 = vmatprep.subr.mxu0 0.0
  %213 = vmatpush2.msra.mxu0 0.0
  %214 = vmatprep.subr.mxu0 0.0
  %215 = vmatpush2.msra.mxu0 0.0
  %216 = vmatprep.subr.mxu0 0.0
  %217 = vmatpush2.msra.mxu0 0.0
  %218 = vmatprep.subr.mxu0 0.0
  %219 = vmatpush2.msra.mxu0 0.0
  %220 = vmatprep.subr.mxu0 0.0
  %221 = vmatpush2.msra.mxu0 0.0
  %222 = vmatprep.subr.mxu0 0.0
  %223 = vmatpush2.msra.mxu0 0.0
  %224 = vmatprep.subr.mxu0 0.0
  %225 = vmatpush2.msra.mxu0 0.0
  %226 = vmatprep.subr.mxu0 0.0
  %227 = vmatpush2.msra.mxu0 0.0
  %228 = vmatprep.subr.mxu0 0.0
  %229 = vmatpush2.msra.mxu0 0.0
  %230 = vmatprep.subr.mxu0 0.0
  %231 = vmatpush2.msra.mxu0 0.0
  %232 = vmatprep.subr.mxu0 0.0
  %233 = vmatpush2.msra.mxu0 0.0
  %234 = vmatprep.subr.mxu0 0.0
  %235 = vmatpush2.msra.mxu0 0.0
  %236 = vmatprep.subr.mxu0 0.0
  %237 = vmatpush2.msra.mxu0 0.0
  %238 = vmatprep.subr.mxu0 0.0
  %239 = vmatpush2.msra.mxu0 0.0
  %240 = vmatprep.subr.mxu0 0.0
  %241 = vmatpush2.msra.mxu0 0.0
  %242 = vmatprep.subr.mxu0 0.0
  %243 = vmatpush2.msra.mxu0 0.0
  %244 = vmatprep.mubr.f32.mxu0 0.0
  %245 = vmatmul.mubr.f32.gmra.mxu0 %v178
  %v246 = vpop.f32.mrf.mxu0
  %v247 = vadd.f32 %v174, %v246
  %v248 = vpop.f32.mrf.mxu0
  %249 = vdwg.mxu0
  %v250 = vmax.f32 %v247, 0.0
  %v251 = vld [vmem:[%s7] sm:$0xff]
  %v252 = vld [vmem:[%s8] sm:$0x1]
  %v254 = vlaneseq
  %v255 = vshrl.u32 %v254, 7
  %v256 = vsub.s32 0, %v255
  %v257 = vrot.slane %v252, %v256
  %v260 = vsel %vm176, %v250, 0
  %262 = vmatprep.subr.mxu0 0.0
  %263 = vmatpush1.msra.mxu0 0.0
  %264 = vmatprep.subr.mxu0 0.0
  %265 = vmatpush1.msra.mxu0 0.0
  %266 = vmatprep.subr.mxu0 0.0
  %267 = vmatpush1.msra.mxu0 0.0
  %268 = vmatprep.subr.mxu0 0.0
  %269 = vmatpush1.msra.mxu0 0.0
  %270 = vmatprep.subr.mxu0 0.0
  %271 = vmatpush1.msra.mxu0 0.0
  %272 = vmatprep.subr.mxu0 0.0
  %273 = vmatpush1.msra.mxu0 0.0
  %274 = vmatprep.subr.mxu0 0.0
  %275 = vmatpush1.msra.mxu0 0.0
  %276 = vmatprep.subr.mxu0 0.0
  %277 = vmatpush1.msra.mxu0 0.0
  %278 = vmatprep.subr.mxu0 0.0
  %279 = vmatpush1.msra.mxu0 0.0
  %280 = vmatprep.subr.mxu0 0.0
  %281 = vmatpush1.msra.mxu0 0.0
  %282 = vmatprep.subr.mxu0 0.0
  %283 = vmatpush1.msra.mxu0 0.0
  %284 = vmatprep.subr.mxu0 0.0
  %285 = vmatpush1.msra.mxu0 0.0
  %286 = vmatprep.subr.mxu0 0.0
  %287 = vmatpush1.msra.mxu0 0.0
  %288 = vmatprep.subr.mxu0 0.0
  %289 = vmatpush1.msra.mxu0 0.0
  %290 = vmatprep.subr.mxu0 0.0
  %291 = vmatpush1.msra.mxu0 0.0
  %292 = vmatprep.subr.mxu0 0.0
  %293 = vmatpush1.msra.mxu0 %v251
  %294 = vmatprep.subr.mxu0 0.0
  %295 = vmatpush2.msra.mxu0 0.0
  %296 = vmatprep.subr.mxu0 0.0
  %297 = vmatpush2.msra.mxu0 0.0
  %298 = vmatprep.subr.mxu0 0.0
  %299 = vmatpush2.msra.mxu0 0.0
  %300 = vmatprep.subr.mxu0 0.0
  %301 = vmatpush2.msra.mxu0 0.0
  %302 = vmatprep.subr.mxu0 0.0
  %303 = vmatpush2.msra.mxu0 0.0
  %304 = vmatprep.subr.mxu0 0.0
  %305 = vmatpush2.msra.mxu0 0.0
  %306 = vmatprep.subr.mxu0 0.0
  %307 = vmatpush2.msra.mxu0 0.0
  %308 = vmatprep.subr.mxu0 0.0
  %309 = vmatpush2.msra.mxu0 0.0
  %310 = vmatprep.subr.mxu0 0.0
  %311 = vmatpush2.msra.mxu0 0.0
  %312 = vmatprep.subr.mxu0 0.0
  %313 = vmatpush2.msra.mxu0 0.0
  %314 = vmatprep.subr.mxu0 0.0
  %315 = vmatpush2.msra.mxu0 0.0
  %316 = vmatprep.subr.mxu0 0.0
  %317 = vmatpush2.msra.mxu0 0.0
  %318 = vmatprep.subr.mxu0 0.0
  %319 = vmatpush2.msra.mxu0 0.0
  %320 = vmatprep.subr.mxu0 0.0
  %321 = vmatpush2.msra.mxu0 0.0
  %322 = vmatprep.subr.mxu0 0.0
  %323 = vmatpush2.msra.mxu0 0.0
  %324 = vmatprep.subr.mxu0 0.0
  %325 = vmatpush2.msra.mxu0 0.0
  %326 = vmatprep.mubr.f32.mxu0 0.0
  %327 = vmatmul.mubr.f32.gmra.mxu0 %v260
  %v328 = vpop.f32.mrf.mxu0
  %v329 = vadd.f32 %v257, %v328
  %v330 = vpop.f32.mrf.mxu0
  %331 = vdwg.mxu0
  %v332 = vmul.f32 %v329, 0.5
  %v333 = vmul.f32 %v332, 1.442695
  %v334 = vpow.pop %v333
  %v335 = vld [vmem:[%s1] sm:$0x3]
  %337 = vrot.lane.b32.xlu0 %v334, 120
  %v338 = vpop.permute.xlu0 %337
  %v340 = vmul.f32 %v335, %v338
  %v341 = vadd.f32 %v340, %v329
  %v342 = vld [vmem:[%s9] sm:$0xff]
  %v343 = vld [vmem:[%s9 + $0x8] sm:$0xff]
  %v344 = vld [vmem:[%s9 + $0x10] sm:$0xff]
  %v345 = vld [vmem:[%s9 + $0x18] sm:$0xff]
  %v346 = vld [vmem:[%s10] sm:$0xff]
  %v347 = vld [vmem:[%s11] sm:$0x1]
  %v349 = vlaneseq
  %v350 = vshrl.u32 %v349, 7
  %v351 = vsub.s32 0, %v350
  %v352 = vrot.slane %v347, %v351
  %v355 = vsel %vm176, %v341, 0
  %357 = vmatprep.subr.mxu0 0.0
  %358 = vmatpush1.msra.mxu0 0.0
  %359 = vmatprep.subr.mxu0 0.0
  %360 = vmatpush1.msra.mxu0 0.0
  %361 = vmatprep.subr.mxu0 0.0
  %362 = vmatpush1.msra.mxu0 0.0
  %363 = vmatprep.subr.mxu0 0.0
  %364 = vmatpush1.msra.mxu0 0.0
  %365 = vmatprep.subr.mxu0 0.0
  %366 = vmatpush1.msra.mxu0 0.0
  %367 = vmatprep.subr.mxu0 0.0
  %368 = vmatpush1.msra.mxu0 0.0
  %369 = vmatprep.subr.mxu0 0.0
  %370 = vmatpush1.msra.mxu0 0.0
  %371 = vmatprep.subr.mxu0 0.0
  %372 = vmatpush1.msra.mxu0 0.0
  %373 = vmatprep.subr.mxu0 0.0
  %374 = vmatpush1.msra.mxu0 0.0
  %375 = vmatprep.subr.mxu0 0.0
  %376 = vmatpush1.msra.mxu0 0.0
  %377 = vmatprep.subr.mxu0 0.0
  %378 = vmatpush1.msra.mxu0 0.0
  %379 = vmatprep.subr.mxu0 0.0
  %380 = vmatpush1.msra.mxu0 0.0
  %381 = vmatprep.subr.mxu0 0.0
  %382 = vmatpush1.msra.mxu0 0.0
  %383 = vmatprep.subr.mxu0 0.0
  %384 = vmatpush1.msra.mxu0 0.0
  %385 = vmatprep.subr.mxu0 0.0
  %386 = vmatpush1.msra.mxu0 0.0
  %387 = vmatprep.subr.mxu0 0.0
  %388 = vmatpush1.msra.mxu0 %v346
  %389 = vmatprep.subr.mxu0 0.0
  %390 = vmatpush2.msra.mxu0 0.0
  %391 = vmatprep.subr.mxu0 0.0
  %392 = vmatpush2.msra.mxu0 0.0
  %393 = vmatprep.subr.mxu0 0.0
  %394 = vmatpush2.msra.mxu0 0.0
  %395 = vmatprep.subr.mxu0 0.0
  %396 = vmatpush2.msra.mxu0 0.0
  %397 = vmatprep.subr.mxu0 0.0
  %398 = vmatpush2.msra.mxu0 0.0
  %399 = vmatprep.subr.mxu0 0.0
  %400 = vmatpush2.msra.mxu0 0.0
  %401 = vmatprep.subr.mxu0 0.0
  %402 = vmatpush2.msra.mxu0 0.0
  %403 = vmatprep.subr.mxu0 0.0
  %404 = vmatpush2.msra.mxu0 0.0
  %405 = vmatprep.subr.mxu0 0.0
  %406 = vmatpush2.msra.mxu0 0.0
  %407 = vmatprep.subr.mxu0 0.0
  %408 = vmatpush2.msra.mxu0 0.0
  %409 = vmatprep.subr.mxu0 0.0
  %410 = vmatpush2.msra.mxu0 0.0
  %411 = vmatprep.subr.mxu0 0.0
  %412 = vmatpush2.msra.mxu0 0.0
  %413 = vmatprep.subr.mxu0 0.0
  %414 = vmatpush2.msra.mxu0 0.0
  %415 = vmatprep.subr.mxu0 0.0
  %416 = vmatpush2.msra.mxu0 0.0
  %417 = vmatprep.subr.mxu0 0.0
  %418 = vmatpush2.msra.mxu0 0.0
  %419 = vmatprep.subr.mxu0 0.0
  %420 = vmatpush2.msra.mxu0 0.0
  %421 = vmatprep.mubr.f32.mxu0 0.0
  %422 = vmatmul.mubr.f32.gmra.mxu0 %v355
  %v423 = vpop.f32.mrf.mxu0
  %v424 = vadd.f32 %v352, %v423
  %v425 = vpop.f32.mrf.mxu0
  %426 = vdwg.mxu0
  %v427 = vld [vmem:[%s12] sm:$0xff]
  %v428 = vld [vmem:[%s12 + $0x8] sm:$0xff]
  %v429 = vld [vmem:[%s12 + $0x10] sm:$0xff]
  %v430 = vld [vmem:[%s12 + $0x18] sm:$0xff]
  %v431 = vld [vmem:[%s12 + $0x20] sm:$0xff]
  %v432 = vld [vmem:[%s12 + $0x28] sm:$0xff]
  %v433 = vld [vmem:[%s12 + $0x30] sm:$0xff]
  %v434 = vld [vmem:[%s12 + $0x38] sm:$0xff]
  %v435 = vld [vmem:[%s13] sm:$0xff]
  %v436 = vld [vmem:[%s13 + $0x8] sm:$0xff]
  %v437 = vld [vmem:[%s13 + $0x10] sm:$0xff]
  %v438 = vld [vmem:[%s13 + $0x18] sm:$0xff]
  %v439 = vld [vmem:[%s13 + $0x20] sm:$0xff]
  %v440 = vld [vmem:[%s13 + $0x28] sm:$0xff]
  %v441 = vld [vmem:[%s13 + $0x30] sm:$0xff]
  %v442 = vld [vmem:[%s13 + $0x38] sm:$0xff]
  %444 = vset.pattern.permute.xlu0 0
  %445 = vperm.xlu0 %444, %v435
  %v446 = vpop.permute.xlu0 %445
  %449 = vset.pattern.permute.xlu0 0
  %450 = vperm.xlu0 %449, %v436
  %v451 = vpop.permute.xlu0 %450
  %454 = vset.pattern.permute.xlu0 0
  %455 = vperm.xlu0 %454, %v437
  %v456 = vpop.permute.xlu0 %455
  %459 = vset.pattern.permute.xlu0 0
  %460 = vperm.xlu0 %459, %v438
  %v461 = vpop.permute.xlu0 %460
  %464 = vset.pattern.permute.xlu0 0
  %465 = vperm.xlu0 %464, %v439
  %v466 = vpop.permute.xlu0 %465
  %469 = vset.pattern.permute.xlu0 0
  %470 = vperm.xlu0 %469, %v440
  %v471 = vpop.permute.xlu0 %470
  %474 = vset.pattern.permute.xlu0 0
  %475 = vperm.xlu0 %474, %v441
  %v476 = vpop.permute.xlu0 %475
  %479 = vset.pattern.permute.xlu0 0
  %480 = vperm.xlu0 %479, %v442
  %v481 = vpop.permute.xlu0 %480
  %v484 = vsel %vm65, %v427, 0
  %v487 = vsel %vm65, %v428, 0
  %v490 = vsel %vm65, %v429, 0
  %v493 = vsel %vm65, %v430, 0
  %v496 = vsel %vm65, %v431, 0
  %v499 = vsel %vm65, %v432, 0
  %v502 = vsel %vm65, %v433, 0
  %v505 = vsel %vm65, %v434, 0
  %507 = vmatprep.subr.mxu0 0.0
  %508 = vmatpush1.msra.mxu0 0.0
  %509 = vmatprep.subr.mxu0 0.0
  %510 = vmatpush1.msra.mxu0 0.0
  %511 = vmatprep.subr.mxu0 0.0
  %512 = vmatpush1.msra.mxu0 0.0
  %513 = vmatprep.subr.mxu0 0.0
  %514 = vmatpush1.msra.mxu0 0.0
  %515 = vmatprep.subr.mxu0 0.0
  %516 = vmatpush1.msra.mxu0 0.0
  %517 = vmatprep.subr.mxu0 0.0
  %518 = vmatpush1.msra.mxu0 0.0
  %519 = vmatprep.subr.mxu0 0.0
  %520 = vmatpush1.msra.mxu0 0.0
  %521 = vmatprep.subr.mxu0 0.0
  %522 = vmatpush1.msra.mxu0 0.0
  %523 = vmatprep.subr.mxu0 0.0
  %524 = vmatpush1.msra.mxu0 0.0
  %525 = vmatprep.subr.mxu0 0.0
  %526 = vmatpush1.msra.mxu0 0.0
  %527 = vmatprep.subr.mxu0 0.0
  %528 = vmatpush1.msra.mxu0 0.0
  %529 = vmatprep.subr.mxu0 0.0
  %530 = vmatpush1.msra.mxu0 0.0
  %531 = vmatprep.subr.mxu0 0.0
  %532 = vmatpush1.msra.mxu0 %v345
  %533 = vmatprep.subr.mxu0 0.0
  %534 = vmatpush1.msra.mxu0 %v344
  %535 = vmatprep.subr.mxu0 0.0
  %536 = vmatpush1.msra.mxu0 %v343
  %537 = vmatprep.subr.mxu0 0.0
  %538 = vmatpush1.msra.mxu0 %v342
  %539 = vmatprep.subr.mxu0 0.0
  %540 = vmatpush2.msra.mxu0 0.0
  %541 = vmatprep.subr.mxu0 0.0
  %542 = vmatpush2.msra.mxu0 0.0
  %543 = vmatprep.subr.mxu0 0.0
  %544 = vmatpush2.msra.mxu0 0.0
  %545 = vmatprep.subr.mxu0 0.0
  %546 = vmatpush2.msra.mxu0 0.0
  %547 = vmatprep.subr.mxu0 0.0
  %548 = vmatpush2.msra.mxu0 0.0
  %549 = vmatprep.subr.mxu0 0.0
  %550 = vmatpush2.msra.mxu0 0.0
  %551 = vmatprep.subr.mxu0 0.0
  %552 = vmatpush2.msra.mxu0 0.0
  %553 = vmatprep.subr.mxu0 0.0
  %554 = vmatpush2.msra.mxu0 0.0
  %555 = vmatprep.subr.mxu0 0.0
  %556 = vmatpush2.msra.mxu0 0.0
  %557 = vmatprep.subr.mxu0 0.0
  %558 = vmatpush2.msra.mxu0 0.0
  %559 = vmatprep.subr.mxu0 0.0
  %560 = vmatpush2.msra.mxu0 0.0
  %561 = vmatprep.subr.mxu0 0.0
  %562 = vmatpush2.msra.mxu0 0.0
  %563 = vmatprep.subr.mxu0 0.0
  %564 = vmatpush2.msra.mxu0 0.0
  %565 = vmatprep.subr.mxu0 0.0
  %566 = vmatpush2.msra.mxu0 0.0
  %567 = vmatprep.subr.mxu0 0.0
  %568 = vmatpush2.msra.mxu0 0.0
  %569 = vmatprep.subr.mxu0 0.0
  %570 = vmatpush2.msra.mxu0 0.0
  %571 = vmatprep.mubr.f32.mxu0 0.0
  %572 = vmatmul.mubr.f32.gmra.mxu0 %v484
  %v573 = vpop.f32.mrf.mxu0
  %v574 = vadd.f32 %v446, %v573
  %v575 = vpop.f32.mrf.mxu0
  %576 = vmatprep.mubr.f32.mxu0 0.0
  %577 = vmatmul.mubr.f32.gmra.mxu0 %v487
  %v578 = vpop.f32.mrf.mxu0
  %v579 = vadd.f32 %v451, %v578
  %v580 = vpop.f32.mrf.mxu0
  %581 = vmatprep.mubr.f32.mxu0 0.0
  %582 = vmatmul.mubr.f32.gmra.mxu0 %v490
  %v583 = vpop.f32.mrf.mxu0
  %v584 = vadd.f32 %v456, %v583
  %v585 = vpop.f32.mrf.mxu0
  %586 = vmatprep.mubr.f32.mxu0 0.0
  %587 = vmatmul.mubr.f32.gmra.mxu0 %v493
  %v588 = vpop.f32.mrf.mxu0
  %v589 = vadd.f32 %v461, %v588
  %v590 = vpop.f32.mrf.mxu0
  %591 = vmatprep.mubr.f32.mxu0 0.0
  %592 = vmatmul.mubr.f32.gmra.mxu0 %v496
  %v593 = vpop.f32.mrf.mxu0
  %v594 = vadd.f32 %v466, %v593
  %v595 = vpop.f32.mrf.mxu0
  %596 = vmatprep.mubr.f32.mxu0 0.0
  %597 = vmatmul.mubr.f32.gmra.mxu0 %v499
  %v598 = vpop.f32.mrf.mxu0
  %v599 = vadd.f32 %v471, %v598
  %v600 = vpop.f32.mrf.mxu0
  %601 = vmatprep.mubr.f32.mxu0 0.0
  %602 = vmatmul.mubr.f32.gmra.mxu0 %v502
  %v603 = vpop.f32.mrf.mxu0
  %v604 = vadd.f32 %v476, %v603
  %v605 = vpop.f32.mrf.mxu0
  %606 = vmatprep.mubr.f32.mxu0 0.0
  %607 = vmatmul.mubr.f32.gmra.mxu0 %v505
  %v608 = vpop.f32.mrf.mxu0
  %v609 = vadd.f32 %v481, %v608
  %v610 = vpop.f32.mrf.mxu0
  %611 = vdwg.mxu0
  %v612 = vmax.f32 %v574, 0.0
  %v613 = vmax.f32 %v579, 0.0
  %v614 = vmax.f32 %v584, 0.0
  %v615 = vmax.f32 %v589, 0.0
  %v616 = vmax.f32 %v594, 0.0
  %v617 = vmax.f32 %v599, 0.0
  %v618 = vmax.f32 %v604, 0.0
  %v619 = vmax.f32 %v609, 0.0
  %620 = vmatprep.subr.mxu0 0.0
  %621 = vmatpush1.msra.mxu0 0.0
  %622 = vmatprep.subr.mxu0 0.0
  %623 = vmatpush1.msra.mxu0 0.0
  %624 = vmatprep.subr.mxu0 0.0
  %625 = vmatpush1.msra.mxu0 0.0
  %626 = vmatprep.subr.mxu0 0.0
  %627 = vmatpush1.msra.mxu0 0.0
  %628 = vmatprep.subr.mxu0 0.0
  %629 = vmatpush1.msra.mxu0 0.0
  %630 = vmatprep.subr.mxu0 0.0
  %631 = vmatpush1.msra.mxu0 0.0
  %632 = vmatprep.subr.mxu0 0.0
  %633 = vmatpush1.msra.mxu0 0.0
  %634 = vmatprep.subr.mxu0 0.0
  %635 = vmatpush1.msra.mxu0 0.0
  %636 = vmatprep.subr.mxu0 0.0
  %637 = vmatpush1.msra.mxu0 0.0
  %638 = vmatprep.subr.mxu0 0.0
  %639 = vmatpush1.msra.mxu0 0.0
  %640 = vmatprep.subr.mxu0 0.0
  %641 = vmatpush1.msra.mxu0 0.0
  %642 = vmatprep.subr.mxu0 0.0
  %643 = vmatpush1.msra.mxu0 0.0
  %644 = vmatprep.subr.mxu0 0.0
  %645 = vmatpush1.msra.mxu0 %v615
  %646 = vmatprep.subr.mxu0 0.0
  %647 = vmatpush1.msra.mxu0 %v614
  %648 = vmatprep.subr.mxu0 0.0
  %649 = vmatpush1.msra.mxu0 %v613
  %650 = vmatprep.subr.mxu0 0.0
  %651 = vmatpush1.msra.mxu0 %v612
  %652 = vmatprep.subr.mxu0 0.0
  %653 = vmatpush2.msra.mxu0 0.0
  %654 = vmatprep.subr.mxu0 0.0
  %655 = vmatpush2.msra.mxu0 0.0
  %656 = vmatprep.subr.mxu0 0.0
  %657 = vmatpush2.msra.mxu0 0.0
  %658 = vmatprep.subr.mxu0 0.0
  %659 = vmatpush2.msra.mxu0 0.0
  %660 = vmatprep.subr.mxu0 0.0
  %661 = vmatpush2.msra.mxu0 0.0
  %662 = vmatprep.subr.mxu0 0.0
  %663 = vmatpush2.msra.mxu0 0.0
  %664 = vmatprep.subr.mxu0 0.0
  %665 = vmatpush2.msra.mxu0 0.0
  %666 = vmatprep.subr.mxu0 0.0
  %667 = vmatpush2.msra.mxu0 0.0
  %668 = vmatprep.subr.mxu0 0.0
  %669 = vmatpush2.msra.mxu0 0.0
  %670 = vmatprep.subr.mxu0 0.0
  %671 = vmatpush2.msra.mxu0 0.0
  %672 = vmatprep.subr.mxu0 0.0
  %673 = vmatpush2.msra.mxu0 0.0
  %674 = vmatprep.subr.mxu0 0.0
  %675 = vmatpush2.msra.mxu0 0.0
  %676 = vmatprep.subr.mxu0 0.0
  %677 = vmatpush2.msra.mxu0 0.0
  %678 = vmatprep.subr.mxu0 0.0
  %679 = vmatpush2.msra.mxu0 0.0
  %680 = vmatprep.subr.mxu0 0.0
  %681 = vmatpush2.msra.mxu0 0.0
  %682 = vmatprep.subr.mxu0 0.0
  %683 = vmatpush2.msra.mxu0 0.0
  %684 = vmatprep.mubr.f32.mxu0 0.0
  %685 = vmatmul.mubr.f32.gmra.mxu0 %v95
  %v686 = vpop.f32.mrf.mxu0
  %v687 = vadd.f32 0.0, %v686
  %v688 = vpop.f32.mrf.mxu0
  %689 = vdwg.mxu0
  %v690 = vmul.f32 %v687, 0.8
  %v691 = vadd.f32 %v690, %v341
  %v693 = vsel %vm176, %v691, 0
  %v696 = vsel %vm176, %v616, 0
  %v699 = vsel %vm176, %v617, 0
  %v702 = vsel %vm176, %v618, 0
  %v705 = vsel %vm176, %v619, 0
  %707 = vmatprep.subr.mxu0 0.0
  %708 = vmatpush1.xpose.msra.mxu0 0.0
  %709 = vmatprep.subr.mxu0 0.0
  %710 = vmatpush1.xpose.msra.mxu0 0.0
  %711 = vmatprep.subr.mxu0 0.0
  %712 = vmatpush1.xpose.msra.mxu0 0.0
  %713 = vmatprep.subr.mxu0 0.0
  %714 = vmatpush1.xpose.msra.mxu0 0.0
  %715 = vmatprep.subr.mxu0 0.0
  %716 = vmatpush1.xpose.msra.mxu0 0.0
  %717 = vmatprep.subr.mxu0 0.0
  %718 = vmatpush1.xpose.msra.mxu0 0.0
  %719 = vmatprep.subr.mxu0 0.0
  %720 = vmatpush1.xpose.msra.mxu0 0.0
  %721 = vmatprep.subr.mxu0 0.0
  %722 = vmatpush1.xpose.msra.mxu0 0.0
  %723 = vmatprep.subr.mxu0 0.0
  %724 = vmatpush1.xpose.msra.mxu0 0.0
  %725 = vmatprep.subr.mxu0 0.0
  %726 = vmatpush1.xpose.msra.mxu0 0.0
  %727 = vmatprep.subr.mxu0 0.0
  %728 = vmatpush1.xpose.msra.mxu0 0.0
  %729 = vmatprep.subr.mxu0 0.0
  %730 = vmatpush1.xpose.msra.mxu0 0.0
  %731 = vmatprep.subr.mxu0 0.0
  %732 = vmatpush1.xpose.msra.mxu0 %v705
  %733 = vmatprep.subr.mxu0 0.0
  %734 = vmatpush1.xpose.msra.mxu0 %v702
  %735 = vmatprep.subr.mxu0 0.0
  %736 = vmatpush1.xpose.msra.mxu0 %v699
  %737 = vmatprep.subr.mxu0 0.0
  %738 = vmatpush1.xpose.msra.mxu0 %v696
  %739 = vmatprep.subr.mxu0 0.0
  %740 = vmatpush2.xpose.msra.mxu0 0.0
  %741 = vmatprep.subr.mxu0 0.0
  %742 = vmatpush2.xpose.msra.mxu0 0.0
  %743 = vmatprep.subr.mxu0 0.0
  %744 = vmatpush2.xpose.msra.mxu0 0.0
  %745 = vmatprep.subr.mxu0 0.0
  %746 = vmatpush2.xpose.msra.mxu0 0.0
  %747 = vmatprep.subr.mxu0 0.0
  %748 = vmatpush2.xpose.msra.mxu0 0.0
  %749 = vmatprep.subr.mxu0 0.0
  %750 = vmatpush2.xpose.msra.mxu0 0.0
  %751 = vmatprep.subr.mxu0 0.0
  %752 = vmatpush2.xpose.msra.mxu0 0.0
  %753 = vmatprep.subr.mxu0 0.0
  %754 = vmatpush2.xpose.msra.mxu0 0.0
  %755 = vmatprep.subr.mxu0 0.0
  %756 = vmatpush2.xpose.msra.mxu0 0.0
  %757 = vmatprep.subr.mxu0 0.0
  %758 = vmatpush2.xpose.msra.mxu0 0.0
  %759 = vmatprep.subr.mxu0 0.0
  %760 = vmatpush2.xpose.msra.mxu0 0.0
  %761 = vmatprep.subr.mxu0 0.0
  %762 = vmatpush2.xpose.msra.mxu0 0.0
  %763 = vmatprep.subr.mxu0 0.0
  %764 = vmatpush2.xpose.msra.mxu0 0.0
  %765 = vmatprep.subr.mxu0 0.0
  %766 = vmatpush2.xpose.msra.mxu0 0.0
  %767 = vmatprep.subr.mxu0 0.0
  %768 = vmatpush2.xpose.msra.mxu0 0.0
  %769 = vmatprep.subr.mxu0 0.0
  %770 = vmatpush2.xpose.msra.mxu0 0.0
  %771 = vmatprep.mubr.f32.mxu0 0.0
  %772 = vmatmul.mubr.f32.gmra.mxu0 %v693
  %v773 = vpop.f32.mrf.mxu0
  %v774 = vadd.f32 0.0, %v773
  %v775 = vpop.f32.mrf.mxu0
  %776 = vdwg.mxu0
  %v777 = vld [vmem:[%s14] sm:$0xff]
  %v778 = vld [vmem:[%s14 + $0x8] sm:$0xff]
  %v779 = vld [vmem:[%s14 + $0x10] sm:$0xff]
  %v780 = vld [vmem:[%s14 + $0x18] sm:$0xff]
  %v781 = vld [vmem:[%s15] sm:$0x1]
  %v783 = vsel %vm65, %v62, 0
  %v786 = vsel %vm65, %v63, 0
  %788 = vmatprep.subr.mxu0 0.0
  %789 = vmatpush1.msra.mxu0 0.0
  %790 = vmatprep.subr.mxu0 0.0
  %791 = vmatpush1.msra.mxu0 0.0
  %792 = vmatprep.subr.mxu0 0.0
  %793 = vmatpush1.msra.mxu0 0.0
  %794 = vmatprep.subr.mxu0 0.0
  %795 = vmatpush1.msra.mxu0 0.0
  %796 = vmatprep.subr.mxu0 0.0
  %797 = vmatpush1.msra.mxu0 0.0
  %798 = vmatprep.subr.mxu0 0.0
  %799 = vmatpush1.msra.mxu0 0.0
  %800 = vmatprep.subr.mxu0 0.0
  %801 = vmatpush1.msra.mxu0 0.0
  %802 = vmatprep.subr.mxu0 0.0
  %803 = vmatpush1.msra.mxu0 0.0
  %804 = vmatprep.subr.mxu0 0.0
  %805 = vmatpush1.msra.mxu0 0.0
  %806 = vmatprep.subr.mxu0 0.0
  %807 = vmatpush1.msra.mxu0 0.0
  %808 = vmatprep.subr.mxu0 0.0
  %809 = vmatpush1.msra.mxu0 0.0
  %810 = vmatprep.subr.mxu0 0.0
  %811 = vmatpush1.msra.mxu0 0.0
  %812 = vmatprep.subr.mxu0 0.0
  %813 = vmatpush1.msra.mxu0 %v780
  %814 = vmatprep.subr.mxu0 0.0
  %815 = vmatpush1.msra.mxu0 %v779
  %816 = vmatprep.subr.mxu0 0.0
  %817 = vmatpush1.msra.mxu0 %v778
  %818 = vmatprep.subr.mxu0 0.0
  %819 = vmatpush1.msra.mxu0 %v777
  %820 = vmatprep.subr.mxu0 0.0
  %821 = vmatpush2.msra.mxu0 0.0
  %822 = vmatprep.subr.mxu0 0.0
  %823 = vmatpush2.msra.mxu0 0.0
  %824 = vmatprep.subr.mxu0 0.0
  %825 = vmatpush2.msra.mxu0 0.0
  %826 = vmatprep.subr.mxu0 0.0
  %827 = vmatpush2.msra.mxu0 0.0
  %828 = vmatprep.subr.mxu0 0.0
  %829 = vmatpush2.msra.mxu0 0.0
  %830 = vmatprep.subr.mxu0 0.0
  %831 = vmatpush2.msra.mxu0 0.0
  %832 = vmatprep.subr.mxu0 0.0
  %833 = vmatpush2.msra.mxu0 0.0
  %834 = vmatprep.subr.mxu0 0.0
  %835 = vmatpush2.msra.mxu0 0.0
  %836 = vmatprep.subr.mxu0 0.0
  %837 = vmatpush2.msra.mxu0 0.0
  %838 = vmatprep.subr.mxu0 0.0
  %839 = vmatpush2.msra.mxu0 0.0
  %840 = vmatprep.subr.mxu0 0.0
  %841 = vmatpush2.msra.mxu0 0.0
  %842 = vmatprep.subr.mxu0 0.0
  %843 = vmatpush2.msra.mxu0 0.0
  %844 = vmatprep.subr.mxu0 0.0
  %845 = vmatpush2.msra.mxu0 0.0
  %846 = vmatprep.subr.mxu0 0.0
  %847 = vmatpush2.msra.mxu0 0.0
  %848 = vmatprep.subr.mxu0 0.0
  %849 = vmatpush2.msra.mxu0 0.0
  %850 = vmatprep.subr.mxu0 0.0
  %851 = vmatpush2.msra.mxu0 0.0
  %852 = vmatprep.mubr.f32.mxu0 0.0
  %853 = vmatmul.mubr.f32.gmra.mxu0 %v783
  %v854 = vpop.f32.mrf.mxu0
  %v855 = vadd.f32 0.0, %v854
  %v856 = vpop.f32.mrf.mxu0
  %857 = vmatprep.mubr.f32.mxu0 0.0
  %858 = vmatmul.mubr.f32.gmra.mxu0 %v786
  %v859 = vpop.f32.mrf.mxu0
  %v860 = vadd.f32 0.0, %v859
  %v861 = vpop.f32.mrf.mxu0
  %862 = vdwg.mxu0
  %v863 = vld [vmem:[%s16] sm:$0xff]
  %v864 = vld [vmem:[%s16 + $0x8] sm:$0xff]
  %v865 = vld [vmem:[%s16 + $0x10] sm:$0xff]
  %v866 = vld [vmem:[%s16 + $0x18] sm:$0xff]
  %v868 = vsel %vm65, 0.0, 0
  %870 = vmatprep.subr.mxu0 0.0
  %871 = vmatpush1.msra.mxu0 0.0
  %872 = vmatprep.subr.mxu0 0.0
  %873 = vmatpush1.msra.mxu0 0.0
  %874 = vmatprep.subr.mxu0 0.0
  %875 = vmatpush1.msra.mxu0 0.0
  %876 = vmatprep.subr.mxu0 0.0
  %877 = vmatpush1.msra.mxu0 0.0
  %878 = vmatprep.subr.mxu0 0.0
  %879 = vmatpush1.msra.mxu0 0.0
  %880 = vmatprep.subr.mxu0 0.0
  %881 = vmatpush1.msra.mxu0 0.0
  %882 = vmatprep.subr.mxu0 0.0
  %883 = vmatpush1.msra.mxu0 0.0
  %884 = vmatprep.subr.mxu0 0.0
  %885 = vmatpush1.msra.mxu0 0.0
  %886 = vmatprep.subr.mxu0 0.0
  %887 = vmatpush1.msra.mxu0 0.0
  %888 = vmatprep.subr.mxu0 0.0
  %889 = vmatpush1.msra.mxu0 0.0
  %890 = vmatprep.subr.mxu0 0.0
  %891 = vmatpush1.msra.mxu0 0.0
  %892 = vmatprep.subr.mxu0 0.0
  %893 = vmatpush1.msra.mxu0 0.0
  %894 = vmatprep.subr.mxu0 0.0
  %895 = vmatpush1.msra.mxu0 %v866
  %896 = vmatprep.subr.mxu0 0.0
  %897 = vmatpush1.msra.mxu0 %v865
  %898 = vmatprep.subr.mxu0 0.0
  %899 = vmatpush1.msra.mxu0 %v864
  %900 = vmatprep.subr.mxu0 0.0
  %901 = vmatpush1.msra.mxu0 %v863
  %902 = vmatprep.subr.mxu0 0.0
  %903 = vmatpush2.msra.mxu0 0.0
  %904 = vmatprep.subr.mxu0 0.0
  %905 = vmatpush2.msra.mxu0 0.0
  %906 = vmatprep.subr.mxu0 0.0
  %907 = vmatpush2.msra.mxu0 0.0
  %908 = vmatprep.subr.mxu0 0.0
  %909 = vmatpush2.msra.mxu0 0.0
  %910 = vmatprep.subr.mxu0 0.0
  %911 = vmatpush2.msra.mxu0 0.0
  %912 = vmatprep.subr.mxu0 0.0
  %913 = vmatpush2.msra.mxu0 0.0
  %914 = vmatprep.subr.mxu0 0.0
  %915 = vmatpush2.msra.mxu0 0.0
  %916 = vmatprep.subr.mxu0 0.0
  %917 = vmatpush2.msra.mxu0 0.0
  %918 = vmatprep.subr.mxu0 0.0
  %919 = vmatpush2.msra.mxu0 0.0
  %920 = vmatprep.subr.mxu0 0.0
  %921 = vmatpush2.msra.mxu0 0.0
  %922 = vmatprep.subr.mxu0 0.0
  %923 = vmatpush2.msra.mxu0 0.0
  %924 = vmatprep.subr.mxu0 0.0
  %925 = vmatpush2.msra.mxu0 0.0
  %926 = vmatprep.subr.mxu0 0.0
  %927 = vmatpush2.msra.mxu0 0.0
  %928 = vmatprep.subr.mxu0 0.0
  %929 = vmatpush2.msra.mxu0 0.0
  %930 = vmatprep.subr.mxu0 0.0
  %931 = vmatpush2.msra.mxu0 0.0
  %932 = vmatprep.subr.mxu0 0.0
  %933 = vmatpush2.msra.mxu0 0.0
  %934 = vmatprep.mubr.f32.mxu0 0.0
  %935 = vmatmul.mubr.f32.gmra.mxu0 %v868
  %v936 = vpop.f32.mrf.mxu0
  %v937 = vadd.f32 0.0, %v936
  %v938 = vpop.f32.mrf.mxu0
  %939 = vdwg.mxu0
  %v941 = vrot.slane %v937, 1
  %v944 = vadd.f32 %v855, %v937
  %v945 = vadd.f32 %v860, %v941
  %v947 = vlaneseq
  %v948 = vshrl.u32 %v947, 7
  %v949 = vsub.s32 0, %v948
  %v950 = vrot.slane %v781, %v949
  %v952 = vadd.f32 %v944, %v950
  %v953 = vadd.f32 %v945, %v950
  %v954 = vxor.u32 %v952, 2147483648
  %v955 = vxor.u32 %v953, 2147483648
  %v956 = vmul.f32 %v954, 1.442695
  %v957 = vpow.pop %v956
  %v958 = vmul.f32 %v955, 1.442695
  %v959 = vpow.pop %v958
  %v960 = vadd.f32 %v957, 1.0
  %v961 = vadd.f32 %v959, 1.0
  %v962 = vrcp.pop %v960
  %v963 = vmul.f32 1.0, %v962
  %v964 = vrcp.pop %v961
  %v965 = vmul.f32 1.0, %v964
  %v966 = vtanh.pop %v952
  %v967 = vtanh.pop %v953
  %v968 = vmul.f32 %v963, 0.0
  %v969 = vmul.f32 %v965, 0.0
  %972 = vrot.lane.b32.xlu0 %v966, 64
  %v973 = vpop.permute.xlu0 %972
  %974 = vrot.lane.b32.xlu0 %v967, 64
  %v975 = vpop.permute.xlu0 %974
  %v978 = vmul.f32 %v963, %v973
  %v979 = vmul.f32 %v965, %v975
  %982 = vrot.lane.b32.xlu0 %v978, 32
  %v983 = vpop.permute.xlu0 %982
  %984 = vrot.lane.b32.xlu0 %v979, 32
  %v985 = vpop.permute.xlu0 %984
  %v988 = vadd.f32 %v968, %v983
  %v989 = vadd.f32 %v969, %v985
  %v990 = vtanh.pop %v988
  %v991 = vtanh.pop %v989
  %994 = vrot.lane.b32.xlu0 %v990, 64
  %v995 = vpop.permute.xlu0 %994
  %996 = vrot.lane.b32.xlu0 %v991, 64
  %v997 = vpop.permute.xlu0 %996
  %v1000 = vmul.f32 %v963, %v995
  %v1001 = vmul.f32 %v965, %v997
  %vm1002 = vcmp.gt.s32.totalorder %v64, 0
  %v1003 = vsel %vm1002, 1, 0
  %1004 = vset.pattern.permute.xlu0 0
  %1005 = vperm.xlu0 %1004, %v1003
  %v1006 = vpop.permute.xlu0 %1005
  %vm1007 = vcmp.eq.s32.totalorder %v1006, 1
  %v1010 = vrot.slane %v1001, 7
  %v1011 = vsel %vm93, %v1010, %v1000
  %1012 = vrot.lane.b32.xlu0 %v1011, 32
  %v1013 = vpop.permute.xlu0 %1012
  %v1015 = vsel %vm1007, %v1013, 0.0
  %v1018 = vrot.slane %v989, 7
  %v1019 = vsel %vm93, %v1018, %v988
  %1020 = vrot.lane.b32.xlu0 %v1019, 96
  %v1021 = vpop.permute.xlu0 %1020
  %v1023 = vsel %vm1007, %v1021, 0.0
  %v1025 = vsel %vm65, %v1015, 0
  %1027 = vmatprep.subr.mxu0 0.0
  %1028 = vmatpush1.msra.mxu0 0.0
  %1029 = vmatprep.subr.mxu0 0.0
  %1030 = vmatpush1.msra.mxu0 0.0
  %1031 = vmatprep.subr.mxu0 0.0
  %1032 = vmatpush1.msra.mxu0 0.0
  %1033 = vmatprep.subr.mxu0 0.0
  %1034 = vmatpush1.msra.mxu0 0.0
  %1035 = vmatprep.subr.mxu0 0.0
  %1036 = vmatpush1.msra.mxu0 0.0
  %1037 = vmatprep.subr.mxu0 0.0
  %1038 = vmatpush1.msra.mxu0 0.0
  %1039 = vmatprep.subr.mxu0 0.0
  %1040 = vmatpush1.msra.mxu0 0.0
  %1041 = vmatprep.subr.mxu0 0.0
  %1042 = vmatpush1.msra.mxu0 0.0
  %1043 = vmatprep.subr.mxu0 0.0
  %1044 = vmatpush1.msra.mxu0 0.0
  %1045 = vmatprep.subr.mxu0 0.0
  %1046 = vmatpush1.msra.mxu0 0.0
  %1047 = vmatprep.subr.mxu0 0.0
  %1048 = vmatpush1.msra.mxu0 0.0
  %1049 = vmatprep.subr.mxu0 0.0
  %1050 = vmatpush1.msra.mxu0 0.0
  %1051 = vmatprep.subr.mxu0 0.0
  %1052 = vmatpush1.msra.mxu0 %v866
  %1053 = vmatprep.subr.mxu0 0.0
  %1054 = vmatpush1.msra.mxu0 %v865
  %1055 = vmatprep.subr.mxu0 0.0
  %1056 = vmatpush1.msra.mxu0 %v864
  %1057 = vmatprep.subr.mxu0 0.0
  %1058 = vmatpush1.msra.mxu0 %v863
  %1059 = vmatprep.subr.mxu0 0.0
  %1060 = vmatpush2.msra.mxu0 0.0
  %1061 = vmatprep.subr.mxu0 0.0
  %1062 = vmatpush2.msra.mxu0 0.0
  %1063 = vmatprep.subr.mxu0 0.0
  %1064 = vmatpush2.msra.mxu0 0.0
  %1065 = vmatprep.subr.mxu0 0.0
  %1066 = vmatpush2.msra.mxu0 0.0
  %1067 = vmatprep.subr.mxu0 0.0
  %1068 = vmatpush2.msra.mxu0 0.0
  %1069 = vmatprep.subr.mxu0 0.0
  %1070 = vmatpush2.msra.mxu0 0.0
  %1071 = vmatprep.subr.mxu0 0.0
  %1072 = vmatpush2.msra.mxu0 0.0
  %1073 = vmatprep.subr.mxu0 0.0
  %1074 = vmatpush2.msra.mxu0 0.0
  %1075 = vmatprep.subr.mxu0 0.0
  %1076 = vmatpush2.msra.mxu0 0.0
  %1077 = vmatprep.subr.mxu0 0.0
  %1078 = vmatpush2.msra.mxu0 0.0
  %1079 = vmatprep.subr.mxu0 0.0
  %1080 = vmatpush2.msra.mxu0 0.0
  %1081 = vmatprep.subr.mxu0 0.0
  %1082 = vmatpush2.msra.mxu0 0.0
  %1083 = vmatprep.subr.mxu0 0.0
  %1084 = vmatpush2.msra.mxu0 0.0
  %1085 = vmatprep.subr.mxu0 0.0
  %1086 = vmatpush2.msra.mxu0 0.0
  %1087 = vmatprep.subr.mxu0 0.0
  %1088 = vmatpush2.msra.mxu0 0.0
  %1089 = vmatprep.subr.mxu0 0.0
  %1090 = vmatpush2.msra.mxu0 0.0
  %1091 = vmatprep.mubr.f32.mxu0 0.0
  %1092 = vmatmul.mubr.f32.gmra.mxu0 %v1025
  %v1093 = vpop.f32.mrf.mxu0
  %v1094 = vadd.f32 0.0, %v1093
  %v1095 = vpop.f32.mrf.mxu0
  %1096 = vdwg.mxu0
  %v1098 = vrot.slane %v1094, 7
  %v1101 = vadd.f32 %v855, %v1098
  %v1102 = vadd.f32 %v860, %v1094
  %v1103 = vadd.f32 %v1101, %v950
  %v1104 = vadd.f32 %v1102, %v950
  %v1105 = vxor.u32 %v1103, 2147483648
  %v1106 = vxor.u32 %v1104, 2147483648
  %v1107 = vmul.f32 %v1105, 1.442695
  %v1108 = vpow.pop %v1107
  %v1109 = vmul.f32 %v1106, 1.442695
  %v1110 = vpow.pop %v1109
  %v1111 = vadd.f32 %v1108, 1.0
  %v1112 = vadd.f32 %v1110, 1.0
  %v1113 = vrcp.pop %v1111
  %v1114 = vmul.f32 1.0, %v1113
  %v1115 = vrcp.pop %v1112
  %v1116 = vmul.f32 1.0, %v1115
  %v1117 = vtanh.pop %v1103
  %v1118 = vtanh.pop %v1104
  %v1120 = vrot.slane %v1023, 7
  %1121 = vrot.lane.b32.xlu0 %v1120, 32
  %v1122 = vpop.permute.xlu0 %1121
  %1123 = vrot.lane.b32.xlu0 %v1023, 32
  %v1124 = vpop.permute.xlu0 %1123
  %v1127 = vmul.f32 %v1114, %v1122
  %v1128 = vmul.f32 %v1116, %v1124
  %1131 = vrot.lane.b32.xlu0 %v1117, 64
  %v1132 = vpop.permute.xlu0 %1131
  %1133 = vrot.lane.b32.xlu0 %v1118, 64
  %v1134 = vpop.permute.xlu0 %1133
  %v1137 = vmul.f32 %v1114, %v1132
  %v1138 = vmul.f32 %v1116, %v1134
  %1141 = vrot.lane.b32.xlu0 %v1137, 32
  %v1142 = vpop.permute.xlu0 %1141
  %1143 = vrot.lane.b32.xlu0 %v1138, 32
  %v1144 = vpop.permute.xlu0 %1143
  %v1147 = vadd.f32 %v1127, %v1142
  %v1148 = vadd.f32 %v1128, %v1144
  %v1149 = vtanh.pop %v1147
  %v1150 = vtanh.pop %v1148
  %1153 = vrot.lane.b32.xlu0 %v1149, 64
  %v1154 = vpop.permute.xlu0 %1153
  %1155 = vrot.lane.b32.xlu0 %v1150, 64
  %v1156 = vpop.permute.xlu0 %1155
  %v1159 = vmul.f32 %v1114, %v1154
  %v1160 = vmul.f32 %v1116, %v1156
  %vm1161 = vcmp.gt.s32.totalorder %v64, 1
  %v1162 = vsel %vm1161, 1, 0
  %1163 = vset.pattern.permute.xlu0 0
  %1164 = vperm.xlu0 %1163, %v1162
  %v1165 = vpop.permute.xlu0 %1164
  %vm1166 = vcmp.eq.s32.totalorder %v1165, 1
  %v1169 = vrot.slane %v1159, 1
  %v1170 = vsel %vm93, %v1160, %v1169
  %1171 = vrot.lane.b32.xlu0 %v1170, 32
  %v1172 = vpop.permute.xlu0 %1171
  %v1174 = vsel %vm1166, %v1172, %v1015
  %v1177 = vrot.slane %v1147, 1
  %v1178 = vsel %vm93, %v1148, %v1177
  %1179 = vrot.lane.b32.xlu0 %v1178, 96
  %v1180 = vpop.permute.xlu0 %1179
  %v1182 = vsel %vm1166, %v1180, %v1023
  %v1184 = vsel %vm65, %v1174, 0
  %1186 = vmatprep.subr.mxu0 0.0
  %1187 = vmatpush1.msra.mxu0 0.0
  %1188 = vmatprep.subr.mxu0 0.0
  %1189 = vmatpush1.msra.mxu0 0.0
  %1190 = vmatprep.subr.mxu0 0.0
  %1191 = vmatpush1.msra.mxu0 0.0
  %1192 = vmatprep.subr.mxu0 0.0
  %1193 = vmatpush1.msra.mxu0 0.0
  %1194 = vmatprep.subr.mxu0 0.0
  %1195 = vmatpush1.msra.mxu0 0.0
  %1196 = vmatprep.subr.mxu0 0.0
  %1197 = vmatpush1.msra.mxu0 0.0
  %1198 = vmatprep.subr.mxu0 0.0
  %1199 = vmatpush1.msra.mxu0 0.0
  %1200 = vmatprep.subr.mxu0 0.0
  %1201 = vmatpush1.msra.mxu0 0.0
  %1202 = vmatprep.subr.mxu0 0.0
  %1203 = vmatpush1.msra.mxu0 0.0
  %1204 = vmatprep.subr.mxu0 0.0
  %1205 = vmatpush1.msra.mxu0 0.0
  %1206 = vmatprep.subr.mxu0 0.0
  %1207 = vmatpush1.msra.mxu0 0.0
  %1208 = vmatprep.subr.mxu0 0.0
  %1209 = vmatpush1.msra.mxu0 0.0
  %1210 = vmatprep.subr.mxu0 0.0
  %1211 = vmatpush1.msra.mxu0 %v866
  %1212 = vmatprep.subr.mxu0 0.0
  %1213 = vmatpush1.msra.mxu0 %v865
  %1214 = vmatprep.subr.mxu0 0.0
  %1215 = vmatpush1.msra.mxu0 %v864
  %1216 = vmatprep.subr.mxu0 0.0
  %1217 = vmatpush1.msra.mxu0 %v863
  %1218 = vmatprep.subr.mxu0 0.0
  %1219 = vmatpush2.msra.mxu0 0.0
  %1220 = vmatprep.subr.mxu0 0.0
  %1221 = vmatpush2.msra.mxu0 0.0
  %1222 = vmatprep.subr.mxu0 0.0
  %1223 = vmatpush2.msra.mxu0 0.0
  %1224 = vmatprep.subr.mxu0 0.0
  %1225 = vmatpush2.msra.mxu0 0.0
  %1226 = vmatprep.subr.mxu0 0.0
  %1227 = vmatpush2.msra.mxu0 0.0
  %1228 = vmatprep.subr.mxu0 0.0
  %1229 = vmatpush2.msra.mxu0 0.0
  %1230 = vmatprep.subr.mxu0 0.0
  %1231 = vmatpush2.msra.mxu0 0.0
  %1232 = vmatprep.subr.mxu0 0.0
  %1233 = vmatpush2.msra.mxu0 0.0
  %1234 = vmatprep.subr.mxu0 0.0
  %1235 = vmatpush2.msra.mxu0 0.0
  %1236 = vmatprep.subr.mxu0 0.0
  %1237 = vmatpush2.msra.mxu0 0.0
  %1238 = vmatprep.subr.mxu0 0.0
  %1239 = vmatpush2.msra.mxu0 0.0
  %1240 = vmatprep.subr.mxu0 0.0
  %1241 = vmatpush2.msra.mxu0 0.0
  %1242 = vmatprep.subr.mxu0 0.0
  %1243 = vmatpush2.msra.mxu0 0.0
  %1244 = vmatprep.subr.mxu0 0.0
  %1245 = vmatpush2.msra.mxu0 0.0
  %1246 = vmatprep.subr.mxu0 0.0
  %1247 = vmatpush2.msra.mxu0 0.0
  %1248 = vmatprep.subr.mxu0 0.0
  %1249 = vmatpush2.msra.mxu0 0.0
  %1250 = vmatprep.mubr.f32.mxu0 0.0
  %1251 = vmatmul.mubr.f32.gmra.mxu0 %v1184
  %v1252 = vpop.f32.mrf.mxu0
  %v1253 = vadd.f32 0.0, %v1252
  %v1254 = vpop.f32.mrf.mxu0
  %1255 = vdwg.mxu0
  %v1257 = vrot.slane %v1253, 6
  %v1258 = vrot.slane %v1253, 7
  %v1261 = vadd.f32 %v855, %v1257
  %v1262 = vadd.f32 %v860, %v1258
  %v1263 = vadd.f32 %v1261, %v950
  %v1264 = vadd.f32 %v1262, %v950
  %v1265 = vxor.u32 %v1263, 2147483648
  %v1266 = vxor.u32 %v1264, 2147483648
  %v1267 = vmul.f32 %v1265, 1.442695
  %v1268 = vpow.pop %v1267
  %v1269 = vmul.f32 %v1266, 1.442695
  %v1270 = vpow.pop %v1269
  %v1271 = vadd.f32 %v1268, 1.0
  %v1272 = vadd.f32 %v1270, 1.0
  %v1273 = vrcp.pop %v1271
  %v1274 = vmul.f32 1.0, %v1273
  %v1275 = vrcp.pop %v1272
  %v1276 = vmul.f32 1.0, %v1275
  %v1277 = vtanh.pop %v1263
  %v1278 = vtanh.pop %v1264
  %v1280 = vrot.slane %v1182, 6
  %v1281 = vrot.slane %v1182, 7
  %1282 = vrot.lane.b32.xlu0 %v1280, 32
  %v1283 = vpop.permute.xlu0 %1282
  %1284 = vrot.lane.b32.xlu0 %v1281, 32
  %v1285 = vpop.permute.xlu0 %1284
  %v1288 = vmul.f32 %v1274, %v1283
  %v1289 = vmul.f32 %v1276, %v1285
  %1292 = vrot.lane.b32.xlu0 %v1277, 64
  %v1293 = vpop.permute.xlu0 %1292
  %1294 = vrot.lane.b32.xlu0 %v1278, 64
  %v1295 = vpop.permute.xlu0 %1294
  %v1298 = vmul.f32 %v1274, %v1293
  %v1299 = vmul.f32 %v1276, %v1295
  %1302 = vrot.lane.b32.xlu0 %v1298, 32
  %v1303 = vpop.permute.xlu0 %1302
  %1304 = vrot.lane.b32.xlu0 %v1299, 32
  %v1305 = vpop.permute.xlu0 %1304
  %v1308 = vadd.f32 %v1288, %v1303
  %v1309 = vadd.f32 %v1289, %v1305
  %v1310 = vtanh.pop %v1308
  %v1311 = vtanh.pop %v1309
  %1314 = vrot.lane.b32.xlu0 %v1310, 64
  %v1315 = vpop.permute.xlu0 %1314
  %1316 = vrot.lane.b32.xlu0 %v1311, 64
  %v1317 = vpop.permute.xlu0 %1316
  %v1320 = vmul.f32 %v1274, %v1315
  %v1321 = vmul.f32 %v1276, %v1317
  %vm1322 = vcmp.gt.s32.totalorder %v64, 2
  %v1323 = vsel %vm1322, 1, 0
  %1324 = vset.pattern.permute.xlu0 0
  %1325 = vperm.xlu0 %1324, %v1323
  %v1326 = vpop.permute.xlu0 %1325
  %vm1327 = vcmp.eq.s32.totalorder %v1326, 1
  %v1330 = vrot.slane %v1320, 2
  %v1331 = vrot.slane %v1321, 1
  %v1332 = vsel %vm93, %v1331, %v1330
  %1333 = vrot.lane.b32.xlu0 %v1332, 32
  %v1334 = vpop.permute.xlu0 %1333
  %v1336 = vsel %vm1327, %v1334, %v1174
  %v1339 = vrot.slane %v1308, 2
  %v1340 = vrot.slane %v1309, 1
  %v1341 = vsel %vm93, %v1340, %v1339
  %1342 = vrot.lane.b32.xlu0 %v1341, 96
  %v1343 = vpop.permute.xlu0 %1342
  %v1345 = vsel %vm1327, %v1343, %v1182
  %v1347 = vsel %vm65, %v1336, 0
  %1349 = vmatprep.subr.mxu0 0.0
  %1350 = vmatpush1.msra.mxu0 0.0
  %1351 = vmatprep.subr.mxu0 0.0
  %1352 = vmatpush1.msra.mxu0 0.0
  %1353 = vmatprep.subr.mxu0 0.0
  %1354 = vmatpush1.msra.mxu0 0.0
  %1355 = vmatprep.subr.mxu0 0.0
  %1356 = vmatpush1.msra.mxu0 0.0
  %1357 = vmatprep.subr.mxu0 0.0
  %1358 = vmatpush1.msra.mxu0 0.0
  %1359 = vmatprep.subr.mxu0 0.0
  %1360 = vmatpush1.msra.mxu0 0.0
  %1361 = vmatprep.subr.mxu0 0.0
  %1362 = vmatpush1.msra.mxu0 0.0
  %1363 = vmatprep.subr.mxu0 0.0
  %1364 = vmatpush1.msra.mxu0 0.0
  %1365 = vmatprep.subr.mxu0 0.0
  %1366 = vmatpush1.msra.mxu0 0.0
  %1367 = vmatprep.subr.mxu0 0.0
  %1368 = vmatpush1.msra.mxu0 0.0
  %1369 = vmatprep.subr.mxu0 0.0
  %1370 = vmatpush1.msra.mxu0 0.0
  %1371 = vmatprep.subr.mxu0 0.0
  %1372 = vmatpush1.msra.mxu0 0.0
  %1373 = vmatprep.subr.mxu0 0.0
  %1374 = vmatpush1.msra.mxu0 %v866
  %1375 = vmatprep.subr.mxu0 0.0
  %1376 = vmatpush1.msra.mxu0 %v865
  %1377 = vmatprep.subr.mxu0 0.0
  %1378 = vmatpush1.msra.mxu0 %v864
  %1379 = vmatprep.subr.mxu0 0.0
  %1380 = vmatpush1.msra.mxu0 %v863
  %1381 = vmatprep.subr.mxu0 0.0
  %1382 = vmatpush2.msra.mxu0 0.0
  %1383 = vmatprep.subr.mxu0 0.0
  %1384 = vmatpush2.msra.mxu0 0.0
  %1385 = vmatprep.subr.mxu0 0.0
  %1386 = vmatpush2.msra.mxu0 0.0
  %1387 = vmatprep.subr.mxu0 0.0
  %1388 = vmatpush2.msra.mxu0 0.0
  %1389 = vmatprep.subr.mxu0 0.0
  %1390 = vmatpush2.msra.mxu0 0.0
  %1391 = vmatprep.subr.mxu0 0.0
  %1392 = vmatpush2.msra.mxu0 0.0
  %1393 = vmatprep.subr.mxu0 0.0
  %1394 = vmatpush2.msra.mxu0 0.0
  %1395 = vmatprep.subr.mxu0 0.0
  %1396 = vmatpush2.msra.mxu0 0.0
  %1397 = vmatprep.subr.mxu0 0.0
  %1398 = vmatpush2.msra.mxu0 0.0
  %1399 = vmatprep.subr.mxu0 0.0
  %1400 = vmatpush2.msra.mxu0 0.0
  %1401 = vmatprep.subr.mxu0 0.0
  %1402 = vmatpush2.msra.mxu0 0.0
  %1403 = vmatprep.subr.mxu0 0.0
  %1404 = vmatpush2.msra.mxu0 0.0
  %1405 = vmatprep.subr.mxu0 0.0
  %1406 = vmatpush2.msra.mxu0 0.0
  %1407 = vmatprep.subr.mxu0 0.0
  %1408 = vmatpush2.msra.mxu0 0.0
  %1409 = vmatprep.subr.mxu0 0.0
  %1410 = vmatpush2.msra.mxu0 0.0
  %1411 = vmatprep.subr.mxu0 0.0
  %1412 = vmatpush2.msra.mxu0 0.0
  %1413 = vmatprep.mubr.f32.mxu0 0.0
  %1414 = vmatmul.mubr.f32.gmra.mxu0 %v1347
  %v1415 = vpop.f32.mrf.mxu0
  %v1416 = vadd.f32 0.0, %v1415
  %v1417 = vpop.f32.mrf.mxu0
  %1418 = vdwg.mxu0
  %v1420 = vrot.slane %v1416, 5
  %v1421 = vrot.slane %v1416, 6
  %v1424 = vadd.f32 %v855, %v1420
  %v1425 = vadd.f32 %v860, %v1421
  %v1426 = vadd.f32 %v1424, %v950
  %v1427 = vadd.f32 %v1425, %v950
  %v1428 = vxor.u32 %v1426, 2147483648
  %v1429 = vxor.u32 %v1427, 2147483648
  %v1430 = vmul.f32 %v1428, 1.442695
  %v1431 = vpow.pop %v1430
  %v1432 = vmul.f32 %v1429, 1.442695
  %v1433 = vpow.pop %v1432
  %v1434 = vadd.f32 %v1431, 1.0
  %v1435 = vadd.f32 %v1433, 1.0
  %v1436 = vrcp.pop %v1434
  %v1437 = vmul.f32 1.0, %v1436
  %v1438 = vrcp.pop %v1435
  %v1439 = vmul.f32 1.0, %v1438
  %v1440 = vtanh.pop %v1426
  %v1441 = vtanh.pop %v1427
  %v1443 = vrot.slane %v1345, 5
  %v1444 = vrot.slane %v1345, 6
  %1445 = vrot.lane.b32.xlu0 %v1443, 32
  %v1446 = vpop.permute.xlu0 %1445
  %1447 = vrot.lane.b32.xlu0 %v1444, 32
  %v1448 = vpop.permute.xlu0 %1447
  %v1451 = vmul.f32 %v1437, %v1446
  %v1452 = vmul.f32 %v1439, %v1448
  %1455 = vrot.lane.b32.xlu0 %v1440, 64
  %v1456 = vpop.permute.xlu0 %1455
  %1457 = vrot.lane.b32.xlu0 %v1441, 64
  %v1458 = vpop.permute.xlu0 %1457
  %v1461 = vmul.f32 %v1437, %v1456
  %v1462 = vmul.f32 %v1439, %v1458
  %1465 = vrot.lane.b32.xlu0 %v1461, 32
  %v1466 = vpop.permute.xlu0 %1465
  %1467 = vrot.lane.b32.xlu0 %v1462, 32
  %v1468 = vpop.permute.xlu0 %1467
  %v1471 = vadd.f32 %v1451, %v1466
  %v1472 = vadd.f32 %v1452, %v1468
  %v1473 = vtanh.pop %v1471
  %v1474 = vtanh.pop %v1472
  %1477 = vrot.lane.b32.xlu0 %v1473, 64
  %v1478 = vpop.permute.xlu0 %1477
  %1479 = vrot.lane.b32.xlu0 %v1474, 64
  %v1480 = vpop.permute.xlu0 %1479
  %v1483 = vmul.f32 %v1437, %v1478
  %v1484 = vmul.f32 %v1439, %v1480
  %vm1485 = vcmp.gt.s32.totalorder %v64, 3
  %v1486 = vsel %vm1485, 1, 0
  %1487 = vset.pattern.permute.xlu0 0
  %1488 = vperm.xlu0 %1487, %v1486
  %v1489 = vpop.permute.xlu0 %1488
  %vm1490 = vcmp.eq.s32.totalorder %v1489, 1
  %v1493 = vrot.slane %v1483, 3
  %v1494 = vrot.slane %v1484, 2
  %v1495 = vsel %vm93, %v1494, %v1493
  %1496 = vrot.lane.b32.xlu0 %v1495, 32
  %v1497 = vpop.permute.xlu0 %1496
  %v1499 = vsel %vm1490, %v1497, %v1336
  %v1502 = vrot.slane %v1471, 3
  %v1503 = vrot.slane %v1472, 2
  %v1504 = vsel %vm93, %v1503, %v1502
  %1505 = vrot.lane.b32.xlu0 %v1504, 96
  %v1506 = vpop.permute.xlu0 %1505
  %v1508 = vsel %vm1490, %v1506, %v1345
  %v1510 = vsel %vm65, %v1499, 0
  %1512 = vmatprep.subr.mxu0 0.0
  %1513 = vmatpush1.msra.mxu0 0.0
  %1514 = vmatprep.subr.mxu0 0.0
  %1515 = vmatpush1.msra.mxu0 0.0
  %1516 = vmatprep.subr.mxu0 0.0
  %1517 = vmatpush1.msra.mxu0 0.0
  %1518 = vmatprep.subr.mxu0 0.0
  %1519 = vmatpush1.msra.mxu0 0.0
  %1520 = vmatprep.subr.mxu0 0.0
  %1521 = vmatpush1.msra.mxu0 0.0
  %1522 = vmatprep.subr.mxu0 0.0
  %1523 = vmatpush1.msra.mxu0 0.0
  %1524 = vmatprep.subr.mxu0 0.0
  %1525 = vmatpush1.msra.mxu0 0.0
  %1526 = vmatprep.subr.mxu0 0.0
  %1527 = vmatpush1.msra.mxu0 0.0
  %1528 = vmatprep.subr.mxu0 0.0
  %1529 = vmatpush1.msra.mxu0 0.0
  %1530 = vmatprep.subr.mxu0 0.0
  %1531 = vmatpush1.msra.mxu0 0.0
  %1532 = vmatprep.subr.mxu0 0.0
  %1533 = vmatpush1.msra.mxu0 0.0
  %1534 = vmatprep.subr.mxu0 0.0
  %1535 = vmatpush1.msra.mxu0 0.0
  %1536 = vmatprep.subr.mxu0 0.0
  %1537 = vmatpush1.msra.mxu0 %v866
  %1538 = vmatprep.subr.mxu0 0.0
  %1539 = vmatpush1.msra.mxu0 %v865
  %1540 = vmatprep.subr.mxu0 0.0
  %1541 = vmatpush1.msra.mxu0 %v864
  %1542 = vmatprep.subr.mxu0 0.0
  %1543 = vmatpush1.msra.mxu0 %v863
  %1544 = vmatprep.subr.mxu0 0.0
  %1545 = vmatpush2.msra.mxu0 0.0
  %1546 = vmatprep.subr.mxu0 0.0
  %1547 = vmatpush2.msra.mxu0 0.0
  %1548 = vmatprep.subr.mxu0 0.0
  %1549 = vmatpush2.msra.mxu0 0.0
  %1550 = vmatprep.subr.mxu0 0.0
  %1551 = vmatpush2.msra.mxu0 0.0
  %1552 = vmatprep.subr.mxu0 0.0
  %1553 = vmatpush2.msra.mxu0 0.0
  %1554 = vmatprep.subr.mxu0 0.0
  %1555 = vmatpush2.msra.mxu0 0.0
  %1556 = vmatprep.subr.mxu0 0.0
  %1557 = vmatpush2.msra.mxu0 0.0
  %1558 = vmatprep.subr.mxu0 0.0
  %1559 = vmatpush2.msra.mxu0 0.0
  %1560 = vmatprep.subr.mxu0 0.0
  %1561 = vmatpush2.msra.mxu0 0.0
  %1562 = vmatprep.subr.mxu0 0.0
  %1563 = vmatpush2.msra.mxu0 0.0
  %1564 = vmatprep.subr.mxu0 0.0
  %1565 = vmatpush2.msra.mxu0 0.0
  %1566 = vmatprep.subr.mxu0 0.0
  %1567 = vmatpush2.msra.mxu0 0.0
  %1568 = vmatprep.subr.mxu0 0.0
  %1569 = vmatpush2.msra.mxu0 0.0
  %1570 = vmatprep.subr.mxu0 0.0
  %1571 = vmatpush2.msra.mxu0 0.0
  %1572 = vmatprep.subr.mxu0 0.0
  %1573 = vmatpush2.msra.mxu0 0.0
  %1574 = vmatprep.subr.mxu0 0.0
  %1575 = vmatpush2.msra.mxu0 0.0
  %1576 = vmatprep.mubr.f32.mxu0 0.0
  %1577 = vmatmul.mubr.f32.gmra.mxu0 %v1510
  %v1578 = vpop.f32.mrf.mxu0
  %v1579 = vadd.f32 0.0, %v1578
  %v1580 = vpop.f32.mrf.mxu0
  %1581 = vdwg.mxu0
  %v1583 = vrot.slane %v1579, 4
  %v1584 = vrot.slane %v1579, 5
  %v1587 = vadd.f32 %v855, %v1583
  %v1588 = vadd.f32 %v860, %v1584
  %v1589 = vadd.f32 %v1587, %v950
  %v1590 = vadd.f32 %v1588, %v950
  %v1591 = vxor.u32 %v1589, 2147483648
  %v1592 = vxor.u32 %v1590, 2147483648
  %v1593 = vmul.f32 %v1591, 1.442695
  %v1594 = vpow.pop %v1593
  %v1595 = vmul.f32 %v1592, 1.442695
  %v1596 = vpow.pop %v1595
  %v1597 = vadd.f32 %v1594, 1.0
  %v1598 = vadd.f32 %v1596, 1.0
  %v1599 = vrcp.pop %v1597
  %v1600 = vmul.f32 1.0, %v1599
  %v1601 = vrcp.pop %v1598
  %v1602 = vmul.f32 1.0, %v1601
  %v1603 = vtanh.pop %v1589
  %v1604 = vtanh.pop %v1590
  %v1606 = vrot.slane %v1508, 4
  %v1607 = vrot.slane %v1508, 5
  %1608 = vrot.lane.b32.xlu0 %v1606, 32
  %v1609 = vpop.permute.xlu0 %1608
  %1610 = vrot.lane.b32.xlu0 %v1607, 32
  %v1611 = vpop.permute.xlu0 %1610
  %v1614 = vmul.f32 %v1600, %v1609
  %v1615 = vmul.f32 %v1602, %v1611
  %1618 = vrot.lane.b32.xlu0 %v1603, 64
  %v1619 = vpop.permute.xlu0 %1618
  %1620 = vrot.lane.b32.xlu0 %v1604, 64
  %v1621 = vpop.permute.xlu0 %1620
  %v1624 = vmul.f32 %v1600, %v1619
  %v1625 = vmul.f32 %v1602, %v1621
  %1628 = vrot.lane.b32.xlu0 %v1624, 32
  %v1629 = vpop.permute.xlu0 %1628
  %1630 = vrot.lane.b32.xlu0 %v1625, 32
  %v1631 = vpop.permute.xlu0 %1630
  %v1634 = vadd.f32 %v1614, %v1629
  %v1635 = vadd.f32 %v1615, %v1631
  %v1636 = vtanh.pop %v1634
  %v1637 = vtanh.pop %v1635
  %1640 = vrot.lane.b32.xlu0 %v1636, 64
  %v1641 = vpop.permute.xlu0 %1640
  %1642 = vrot.lane.b32.xlu0 %v1637, 64
  %v1643 = vpop.permute.xlu0 %1642
  %v1646 = vmul.f32 %v1600, %v1641
  %v1647 = vmul.f32 %v1602, %v1643
  %vm1648 = vcmp.gt.s32.totalorder %v64, 4
  %v1649 = vsel %vm1648, 1, 0
  %1650 = vset.pattern.permute.xlu0 0
  %1651 = vperm.xlu0 %1650, %v1649
  %v1652 = vpop.permute.xlu0 %1651
  %vm1653 = vcmp.eq.s32.totalorder %v1652, 1
  %v1656 = vrot.slane %v1646, 4
  %v1657 = vrot.slane %v1647, 3
  %v1658 = vsel %vm93, %v1657, %v1656
  %1659 = vrot.lane.b32.xlu0 %v1658, 32
  %v1660 = vpop.permute.xlu0 %1659
  %v1662 = vsel %vm1653, %v1660, %v1499
  %v1665 = vrot.slane %v1634, 4
  %v1666 = vrot.slane %v1635, 3
  %v1667 = vsel %vm93, %v1666, %v1665
  %1668 = vrot.lane.b32.xlu0 %v1667, 96
  %v1669 = vpop.permute.xlu0 %1668
  %v1671 = vsel %vm1653, %v1669, %v1508
  %v1673 = vsel %vm65, %v1662, 0
  %1675 = vmatprep.subr.mxu0 0.0
  %1676 = vmatpush1.msra.mxu0 0.0
  %1677 = vmatprep.subr.mxu0 0.0
  %1678 = vmatpush1.msra.mxu0 0.0
  %1679 = vmatprep.subr.mxu0 0.0
  %1680 = vmatpush1.msra.mxu0 0.0
  %1681 = vmatprep.subr.mxu0 0.0
  %1682 = vmatpush1.msra.mxu0 0.0
  %1683 = vmatprep.subr.mxu0 0.0
  %1684 = vmatpush1.msra.mxu0 0.0
  %1685 = vmatprep.subr.mxu0 0.0
  %1686 = vmatpush1.msra.mxu0 0.0
  %1687 = vmatprep.subr.mxu0 0.0
  %1688 = vmatpush1.msra.mxu0 0.0
  %1689 = vmatprep.subr.mxu0 0.0
  %1690 = vmatpush1.msra.mxu0 0.0
  %1691 = vmatprep.subr.mxu0 0.0
  %1692 = vmatpush1.msra.mxu0 0.0
  %1693 = vmatprep.subr.mxu0 0.0
  %1694 = vmatpush1.msra.mxu0 0.0
  %1695 = vmatprep.subr.mxu0 0.0
  %1696 = vmatpush1.msra.mxu0 0.0
  %1697 = vmatprep.subr.mxu0 0.0
  %1698 = vmatpush1.msra.mxu0 0.0
  %1699 = vmatprep.subr.mxu0 0.0
  %1700 = vmatpush1.msra.mxu0 %v866
  %1701 = vmatprep.subr.mxu0 0.0
  %1702 = vmatpush1.msra.mxu0 %v865
  %1703 = vmatprep.subr.mxu0 0.0
  %1704 = vmatpush1.msra.mxu0 %v864
  %1705 = vmatprep.subr.mxu0 0.0
  %1706 = vmatpush1.msra.mxu0 %v863
  %1707 = vmatprep.subr.mxu0 0.0
  %1708 = vmatpush2.msra.mxu0 0.0
  %1709 = vmatprep.subr.mxu0 0.0
  %1710 = vmatpush2.msra.mxu0 0.0
  %1711 = vmatprep.subr.mxu0 0.0
  %1712 = vmatpush2.msra.mxu0 0.0
  %1713 = vmatprep.subr.mxu0 0.0
  %1714 = vmatpush2.msra.mxu0 0.0
  %1715 = vmatprep.subr.mxu0 0.0
  %1716 = vmatpush2.msra.mxu0 0.0
  %1717 = vmatprep.subr.mxu0 0.0
  %1718 = vmatpush2.msra.mxu0 0.0
  %1719 = vmatprep.subr.mxu0 0.0
  %1720 = vmatpush2.msra.mxu0 0.0
  %1721 = vmatprep.subr.mxu0 0.0
  %1722 = vmatpush2.msra.mxu0 0.0
  %1723 = vmatprep.subr.mxu0 0.0
  %1724 = vmatpush2.msra.mxu0 0.0
  %1725 = vmatprep.subr.mxu0 0.0
  %1726 = vmatpush2.msra.mxu0 0.0
  %1727 = vmatprep.subr.mxu0 0.0
  %1728 = vmatpush2.msra.mxu0 0.0
  %1729 = vmatprep.subr.mxu0 0.0
  %1730 = vmatpush2.msra.mxu0 0.0
  %1731 = vmatprep.subr.mxu0 0.0
  %1732 = vmatpush2.msra.mxu0 0.0
  %1733 = vmatprep.subr.mxu0 0.0
  %1734 = vmatpush2.msra.mxu0 0.0
  %1735 = vmatprep.subr.mxu0 0.0
  %1736 = vmatpush2.msra.mxu0 0.0
  %1737 = vmatprep.subr.mxu0 0.0
  %1738 = vmatpush2.msra.mxu0 0.0
  %1739 = vmatprep.mubr.f32.mxu0 0.0
  %1740 = vmatmul.mubr.f32.gmra.mxu0 %v1673
  %v1741 = vpop.f32.mrf.mxu0
  %v1742 = vadd.f32 0.0, %v1741
  %v1743 = vpop.f32.mrf.mxu0
  %1744 = vdwg.mxu0
  %v1746 = vrot.slane %v1742, 3
  %v1747 = vrot.slane %v1742, 4
  %v1750 = vadd.f32 %v855, %v1746
  %v1751 = vadd.f32 %v860, %v1747
  %v1752 = vadd.f32 %v1750, %v950
  %v1753 = vadd.f32 %v1751, %v950
  %v1754 = vxor.u32 %v1752, 2147483648
  %v1755 = vxor.u32 %v1753, 2147483648
  %v1756 = vmul.f32 %v1754, 1.442695
  %v1757 = vpow.pop %v1756
  %v1758 = vmul.f32 %v1755, 1.442695
  %v1759 = vpow.pop %v1758
  %v1760 = vadd.f32 %v1757, 1.0
  %v1761 = vadd.f32 %v1759, 1.0
  %v1762 = vrcp.pop %v1760
  %v1763 = vmul.f32 1.0, %v1762
  %v1764 = vrcp.pop %v1761
  %v1765 = vmul.f32 1.0, %v1764
  %v1766 = vtanh.pop %v1752
  %v1767 = vtanh.pop %v1753
  %v1769 = vrot.slane %v1671, 3
  %v1770 = vrot.slane %v1671, 4
  %1771 = vrot.lane.b32.xlu0 %v1769, 32
  %v1772 = vpop.permute.xlu0 %1771
  %1773 = vrot.lane.b32.xlu0 %v1770, 32
  %v1774 = vpop.permute.xlu0 %1773
  %v1777 = vmul.f32 %v1763, %v1772
  %v1778 = vmul.f32 %v1765, %v1774
  %1781 = vrot.lane.b32.xlu0 %v1766, 64
  %v1782 = vpop.permute.xlu0 %1781
  %1783 = vrot.lane.b32.xlu0 %v1767, 64
  %v1784 = vpop.permute.xlu0 %1783
  %v1787 = vmul.f32 %v1763, %v1782
  %v1788 = vmul.f32 %v1765, %v1784
  %1791 = vrot.lane.b32.xlu0 %v1787, 32
  %v1792 = vpop.permute.xlu0 %1791
  %1793 = vrot.lane.b32.xlu0 %v1788, 32
  %v1794 = vpop.permute.xlu0 %1793
  %v1797 = vadd.f32 %v1777, %v1792
  %v1798 = vadd.f32 %v1778, %v1794
  %v1799 = vtanh.pop %v1797
  %v1800 = vtanh.pop %v1798
  %1803 = vrot.lane.b32.xlu0 %v1799, 64
  %v1804 = vpop.permute.xlu0 %1803
  %1805 = vrot.lane.b32.xlu0 %v1800, 64
  %v1806 = vpop.permute.xlu0 %1805
  %v1809 = vmul.f32 %v1763, %v1804
  %v1810 = vmul.f32 %v1765, %v1806
  %vm1811 = vcmp.gt.s32.totalorder %v64, 5
  %v1812 = vsel %vm1811, 1, 0
  %1813 = vset.pattern.permute.xlu0 0
  %1814 = vperm.xlu0 %1813, %v1812
  %v1815 = vpop.permute.xlu0 %1814
  %vm1816 = vcmp.eq.s32.totalorder %v1815, 1
  %v1819 = vrot.slane %v1809, 5
  %v1820 = vrot.slane %v1810, 4
  %v1821 = vsel %vm93, %v1820, %v1819
  %1822 = vrot.lane.b32.xlu0 %v1821, 32
  %v1823 = vpop.permute.xlu0 %1822
  %v1825 = vsel %vm1816, %v1823, %v1662
  %v1828 = vrot.slane %v1797, 5
  %v1829 = vrot.slane %v1798, 4
  %v1830 = vsel %vm93, %v1829, %v1828
  %1831 = vrot.lane.b32.xlu0 %v1830, 96
  %v1832 = vpop.permute.xlu0 %1831
  %v1834 = vsel %vm1816, %v1832, %v1671
  %v1836 = vsel %vm65, %v1825, 0
  %1838 = vmatprep.subr.mxu0 0.0
  %1839 = vmatpush1.msra.mxu0 0.0
  %1840 = vmatprep.subr.mxu0 0.0
  %1841 = vmatpush1.msra.mxu0 0.0
  %1842 = vmatprep.subr.mxu0 0.0
  %1843 = vmatpush1.msra.mxu0 0.0
  %1844 = vmatprep.subr.mxu0 0.0
  %1845 = vmatpush1.msra.mxu0 0.0
  %1846 = vmatprep.subr.mxu0 0.0
  %1847 = vmatpush1.msra.mxu0 0.0
  %1848 = vmatprep.subr.mxu0 0.0
  %1849 = vmatpush1.msra.mxu0 0.0
  %1850 = vmatprep.subr.mxu0 0.0
  %1851 = vmatpush1.msra.mxu0 0.0
  %1852 = vmatprep.subr.mxu0 0.0
  %1853 = vmatpush1.msra.mxu0 0.0
  %1854 = vmatprep.subr.mxu0 0.0
  %1855 = vmatpush1.msra.mxu0 0.0
  %1856 = vmatprep.subr.mxu0 0.0
  %1857 = vmatpush1.msra.mxu0 0.0
  %1858 = vmatprep.subr.mxu0 0.0
  %1859 = vmatpush1.msra.mxu0 0.0
  %1860 = vmatprep.subr.mxu0 0.0
  %1861 = vmatpush1.msra.mxu0 0.0
  %1862 = vmatprep.subr.mxu0 0.0
  %1863 = vmatpush1.msra.mxu0 %v866
  %1864 = vmatprep.subr.mxu0 0.0
  %1865 = vmatpush1.msra.mxu0 %v865
  %1866 = vmatprep.subr.mxu0 0.0
  %1867 = vmatpush1.msra.mxu0 %v864
  %1868 = vmatprep.subr.mxu0 0.0
  %1869 = vmatpush1.msra.mxu0 %v863
  %1870 = vmatprep.subr.mxu0 0.0
  %1871 = vmatpush2.msra.mxu0 0.0
  %1872 = vmatprep.subr.mxu0 0.0
  %1873 = vmatpush2.msra.mxu0 0.0
  %1874 = vmatprep.subr.mxu0 0.0
  %1875 = vmatpush2.msra.mxu0 0.0
  %1876 = vmatprep.subr.mxu0 0.0
  %1877 = vmatpush2.msra.mxu0 0.0
  %1878 = vmatprep.subr.mxu0 0.0
  %1879 = vmatpush2.msra.mxu0 0.0
  %1880 = vmatprep.subr.mxu0 0.0
  %1881 = vmatpush2.msra.mxu0 0.0
  %1882 = vmatprep.subr.mxu0 0.0
  %1883 = vmatpush2.msra.mxu0 0.0
  %1884 = vmatprep.subr.mxu0 0.0
  %1885 = vmatpush2.msra.mxu0 0.0
  %1886 = vmatprep.subr.mxu0 0.0
  %1887 = vmatpush2.msra.mxu0 0.0
  %1888 = vmatprep.subr.mxu0 0.0
  %1889 = vmatpush2.msra.mxu0 0.0
  %1890 = vmatprep.subr.mxu0 0.0
  %1891 = vmatpush2.msra.mxu0 0.0
  %1892 = vmatprep.subr.mxu0 0.0
  %1893 = vmatpush2.msra.mxu0 0.0
  %1894 = vmatprep.subr.mxu0 0.0
  %1895 = vmatpush2.msra.mxu0 0.0
  %1896 = vmatprep.subr.mxu0 0.0
  %1897 = vmatpush2.msra.mxu0 0.0
  %1898 = vmatprep.subr.mxu0 0.0
  %1899 = vmatpush2.msra.mxu0 0.0
  %1900 = vmatprep.subr.mxu0 0.0
  %1901 = vmatpush2.msra.mxu0 0.0
  %1902 = vmatprep.mubr.f32.mxu0 0.0
  %1903 = vmatmul.mubr.f32.gmra.mxu0 %v1836
  %v1904 = vpop.f32.mrf.mxu0
  %v1905 = vadd.f32 0.0, %v1904
  %v1906 = vpop.f32.mrf.mxu0
  %1907 = vdwg.mxu0
  %v1909 = vrot.slane %v1905, 2
  %v1910 = vrot.slane %v1905, 3
  %v1913 = vadd.f32 %v855, %v1909
  %v1914 = vadd.f32 %v860, %v1910
  %v1915 = vadd.f32 %v1913, %v950
  %v1916 = vadd.f32 %v1914, %v950
  %v1917 = vxor.u32 %v1915, 2147483648
  %v1918 = vxor.u32 %v1916, 2147483648
  %v1919 = vmul.f32 %v1917, 1.442695
  %v1920 = vpow.pop %v1919
  %v1921 = vmul.f32 %v1918, 1.442695
  %v1922 = vpow.pop %v1921
  %v1923 = vadd.f32 %v1920, 1.0
  %v1924 = vadd.f32 %v1922, 1.0
  %v1925 = vrcp.pop %v1923
  %v1926 = vmul.f32 1.0, %v1925
  %v1927 = vrcp.pop %v1924
  %v1928 = vmul.f32 1.0, %v1927
  %v1929 = vtanh.pop %v1915
  %v1930 = vtanh.pop %v1916
  %v1932 = vrot.slane %v1834, 2
  %v1933 = vrot.slane %v1834, 3
  %1934 = vrot.lane.b32.xlu0 %v1932, 32
  %v1935 = vpop.permute.xlu0 %1934
  %1936 = vrot.lane.b32.xlu0 %v1933, 32
  %v1937 = vpop.permute.xlu0 %1936
  %v1940 = vmul.f32 %v1926, %v1935
  %v1941 = vmul.f32 %v1928, %v1937
  %1944 = vrot.lane.b32.xlu0 %v1929, 64
  %v1945 = vpop.permute.xlu0 %1944
  %1946 = vrot.lane.b32.xlu0 %v1930, 64
  %v1947 = vpop.permute.xlu0 %1946
  %v1950 = vmul.f32 %v1926, %v1945
  %v1951 = vmul.f32 %v1928, %v1947
  %1954 = vrot.lane.b32.xlu0 %v1950, 32
  %v1955 = vpop.permute.xlu0 %1954
  %1956 = vrot.lane.b32.xlu0 %v1951, 32
  %v1957 = vpop.permute.xlu0 %1956
  %v1960 = vadd.f32 %v1940, %v1955
  %v1961 = vadd.f32 %v1941, %v1957
  %v1962 = vtanh.pop %v1960
  %v1963 = vtanh.pop %v1961
  %1966 = vrot.lane.b32.xlu0 %v1962, 64
  %v1967 = vpop.permute.xlu0 %1966
  %1968 = vrot.lane.b32.xlu0 %v1963, 64
  %v1969 = vpop.permute.xlu0 %1968
  %v1972 = vmul.f32 %v1926, %v1967
  %v1973 = vmul.f32 %v1928, %v1969
  %vm1974 = vcmp.gt.s32.totalorder %v64, 6
  %v1975 = vsel %vm1974, 1, 0
  %1976 = vset.pattern.permute.xlu0 0
  %1977 = vperm.xlu0 %1976, %v1975
  %v1978 = vpop.permute.xlu0 %1977
  %vm1979 = vcmp.eq.s32.totalorder %v1978, 1
  %v1982 = vrot.slane %v1972, 6
  %v1983 = vrot.slane %v1973, 5
  %v1984 = vsel %vm93, %v1983, %v1982
  %1985 = vrot.lane.b32.xlu0 %v1984, 32
  %v1986 = vpop.permute.xlu0 %1985
  %v1988 = vsel %vm1979, %v1986, %v1825
  %v1991 = vrot.slane %v1960, 6
  %v1992 = vrot.slane %v1961, 5
  %v1993 = vsel %vm93, %v1992, %v1991
  %1994 = vrot.lane.b32.xlu0 %v1993, 96
  %v1995 = vpop.permute.xlu0 %1994
  %v1997 = vsel %vm1979, %v1995, %v1834
  %v1999 = vsel %vm65, %v1988, 0
  %2001 = vmatprep.subr.mxu0 0.0
  %2002 = vmatpush1.msra.mxu0 0.0
  %2003 = vmatprep.subr.mxu0 0.0
  %2004 = vmatpush1.msra.mxu0 0.0
  %2005 = vmatprep.subr.mxu0 0.0
  %2006 = vmatpush1.msra.mxu0 0.0
  %2007 = vmatprep.subr.mxu0 0.0
  %2008 = vmatpush1.msra.mxu0 0.0
  %2009 = vmatprep.subr.mxu0 0.0
  %2010 = vmatpush1.msra.mxu0 0.0
  %2011 = vmatprep.subr.mxu0 0.0
  %2012 = vmatpush1.msra.mxu0 0.0
  %2013 = vmatprep.subr.mxu0 0.0
  %2014 = vmatpush1.msra.mxu0 0.0
  %2015 = vmatprep.subr.mxu0 0.0
  %2016 = vmatpush1.msra.mxu0 0.0
  %2017 = vmatprep.subr.mxu0 0.0
  %2018 = vmatpush1.msra.mxu0 0.0
  %2019 = vmatprep.subr.mxu0 0.0
  %2020 = vmatpush1.msra.mxu0 0.0
  %2021 = vmatprep.subr.mxu0 0.0
  %2022 = vmatpush1.msra.mxu0 0.0
  %2023 = vmatprep.subr.mxu0 0.0
  %2024 = vmatpush1.msra.mxu0 0.0
  %2025 = vmatprep.subr.mxu0 0.0
  %2026 = vmatpush1.msra.mxu0 %v866
  %2027 = vmatprep.subr.mxu0 0.0
  %2028 = vmatpush1.msra.mxu0 %v865
  %2029 = vmatprep.subr.mxu0 0.0
  %2030 = vmatpush1.msra.mxu0 %v864
  %2031 = vmatprep.subr.mxu0 0.0
  %2032 = vmatpush1.msra.mxu0 %v863
  %2033 = vmatprep.subr.mxu0 0.0
  %2034 = vmatpush2.msra.mxu0 0.0
  %2035 = vmatprep.subr.mxu0 0.0
  %2036 = vmatpush2.msra.mxu0 0.0
  %2037 = vmatprep.subr.mxu0 0.0
  %2038 = vmatpush2.msra.mxu0 0.0
  %2039 = vmatprep.subr.mxu0 0.0
  %2040 = vmatpush2.msra.mxu0 0.0
  %2041 = vmatprep.subr.mxu0 0.0
  %2042 = vmatpush2.msra.mxu0 0.0
  %2043 = vmatprep.subr.mxu0 0.0
  %2044 = vmatpush2.msra.mxu0 0.0
  %2045 = vmatprep.subr.mxu0 0.0
  %2046 = vmatpush2.msra.mxu0 0.0
  %2047 = vmatprep.subr.mxu0 0.0
  %2048 = vmatpush2.msra.mxu0 0.0
  %2049 = vmatprep.subr.mxu0 0.0
  %2050 = vmatpush2.msra.mxu0 0.0
  %2051 = vmatprep.subr.mxu0 0.0
  %2052 = vmatpush2.msra.mxu0 0.0
  %2053 = vmatprep.subr.mxu0 0.0
  %2054 = vmatpush2.msra.mxu0 0.0
  %2055 = vmatprep.subr.mxu0 0.0
  %2056 = vmatpush2.msra.mxu0 0.0
  %2057 = vmatprep.subr.mxu0 0.0
  %2058 = vmatpush2.msra.mxu0 0.0
  %2059 = vmatprep.subr.mxu0 0.0
  %2060 = vmatpush2.msra.mxu0 0.0
  %2061 = vmatprep.subr.mxu0 0.0
  %2062 = vmatpush2.msra.mxu0 0.0
  %2063 = vmatprep.subr.mxu0 0.0
  %2064 = vmatpush2.msra.mxu0 0.0
  %2065 = vmatprep.mubr.f32.mxu0 0.0
  %2066 = vmatmul.mubr.f32.gmra.mxu0 %v1999
  %v2067 = vpop.f32.mrf.mxu0
  %v2068 = vadd.f32 0.0, %v2067
  %v2069 = vpop.f32.mrf.mxu0
  %2070 = vdwg.mxu0
  %v2072 = vrot.slane %v2068, 1
  %v2073 = vrot.slane %v2068, 2
  %v2076 = vadd.f32 %v855, %v2072
  %v2077 = vadd.f32 %v860, %v2073
  %v2078 = vadd.f32 %v2076, %v950
  %v2079 = vadd.f32 %v2077, %v950
  %v2080 = vxor.u32 %v2078, 2147483648
  %v2081 = vxor.u32 %v2079, 2147483648
  %v2082 = vmul.f32 %v2080, 1.442695
  %v2083 = vpow.pop %v2082
  %v2084 = vmul.f32 %v2081, 1.442695
  %v2085 = vpow.pop %v2084
  %v2086 = vadd.f32 %v2083, 1.0
  %v2087 = vadd.f32 %v2085, 1.0
  %v2088 = vrcp.pop %v2086
  %v2089 = vmul.f32 1.0, %v2088
  %v2090 = vrcp.pop %v2087
  %v2091 = vmul.f32 1.0, %v2090
  %v2092 = vtanh.pop %v2078
  %v2093 = vtanh.pop %v2079
  %v2095 = vrot.slane %v1997, 1
  %v2096 = vrot.slane %v1997, 2
  %2097 = vrot.lane.b32.xlu0 %v2095, 32
  %v2098 = vpop.permute.xlu0 %2097
  %2099 = vrot.lane.b32.xlu0 %v2096, 32
  %v2100 = vpop.permute.xlu0 %2099
  %v2103 = vmul.f32 %v2089, %v2098
  %v2104 = vmul.f32 %v2091, %v2100
  %2107 = vrot.lane.b32.xlu0 %v2092, 64
  %v2108 = vpop.permute.xlu0 %2107
  %2109 = vrot.lane.b32.xlu0 %v2093, 64
  %v2110 = vpop.permute.xlu0 %2109
  %v2113 = vmul.f32 %v2089, %v2108
  %v2114 = vmul.f32 %v2091, %v2110
  %2117 = vrot.lane.b32.xlu0 %v2113, 32
  %v2118 = vpop.permute.xlu0 %2117
  %2119 = vrot.lane.b32.xlu0 %v2114, 32
  %v2120 = vpop.permute.xlu0 %2119
  %v2123 = vadd.f32 %v2103, %v2118
  %v2124 = vadd.f32 %v2104, %v2120
  %v2125 = vtanh.pop %v2123
  %v2126 = vtanh.pop %v2124
  %2129 = vrot.lane.b32.xlu0 %v2125, 64
  %v2130 = vpop.permute.xlu0 %2129
  %2131 = vrot.lane.b32.xlu0 %v2126, 64
  %v2132 = vpop.permute.xlu0 %2131
  %v2135 = vmul.f32 %v2089, %v2130
  %v2136 = vmul.f32 %v2091, %v2132
  %vm2137 = vcmp.gt.s32.totalorder %v64, 7
  %v2138 = vsel %vm2137, 1, 0
  %2139 = vset.pattern.permute.xlu0 0
  %2140 = vperm.xlu0 %2139, %v2138
  %v2141 = vpop.permute.xlu0 %2140
  %vm2142 = vcmp.eq.s32.totalorder %v2141, 1
  %v2145 = vrot.slane %v2135, 7
  %v2146 = vrot.slane %v2136, 6
  %v2147 = vsel %vm93, %v2146, %v2145
  %2148 = vrot.lane.b32.xlu0 %v2147, 32
  %v2149 = vpop.permute.xlu0 %2148
  %v2151 = vsel %vm2142, %v2149, %v1988
  %v2154 = vrot.slane %v2123, 7
  %v2155 = vrot.slane %v2124, 6
  %v2156 = vsel %vm93, %v2155, %v2154
  %2157 = vrot.lane.b32.xlu0 %v2156, 96
  %v2158 = vpop.permute.xlu0 %2157
  %v2160 = vsel %vm2142, %v2158, %v1997
  %v2162 = vsel %vm65, %v2151, 0
  %2164 = vmatprep.subr.mxu0 0.0
  %2165 = vmatpush1.msra.mxu0 0.0
  %2166 = vmatprep.subr.mxu0 0.0
  %2167 = vmatpush1.msra.mxu0 0.0
  %2168 = vmatprep.subr.mxu0 0.0
  %2169 = vmatpush1.msra.mxu0 0.0
  %2170 = vmatprep.subr.mxu0 0.0
  %2171 = vmatpush1.msra.mxu0 0.0
  %2172 = vmatprep.subr.mxu0 0.0
  %2173 = vmatpush1.msra.mxu0 0.0
  %2174 = vmatprep.subr.mxu0 0.0
  %2175 = vmatpush1.msra.mxu0 0.0
  %2176 = vmatprep.subr.mxu0 0.0
  %2177 = vmatpush1.msra.mxu0 0.0
  %2178 = vmatprep.subr.mxu0 0.0
  %2179 = vmatpush1.msra.mxu0 0.0
  %2180 = vmatprep.subr.mxu0 0.0
  %2181 = vmatpush1.msra.mxu0 0.0
  %2182 = vmatprep.subr.mxu0 0.0
  %2183 = vmatpush1.msra.mxu0 0.0
  %2184 = vmatprep.subr.mxu0 0.0
  %2185 = vmatpush1.msra.mxu0 0.0
  %2186 = vmatprep.subr.mxu0 0.0
  %2187 = vmatpush1.msra.mxu0 0.0
  %2188 = vmatprep.subr.mxu0 0.0
  %2189 = vmatpush1.msra.mxu0 %v866
  %2190 = vmatprep.subr.mxu0 0.0
  %2191 = vmatpush1.msra.mxu0 %v865
  %2192 = vmatprep.subr.mxu0 0.0
  %2193 = vmatpush1.msra.mxu0 %v864
  %2194 = vmatprep.subr.mxu0 0.0
  %2195 = vmatpush1.msra.mxu0 %v863
  %2196 = vmatprep.subr.mxu0 0.0
  %2197 = vmatpush2.msra.mxu0 0.0
  %2198 = vmatprep.subr.mxu0 0.0
  %2199 = vmatpush2.msra.mxu0 0.0
  %2200 = vmatprep.subr.mxu0 0.0
  %2201 = vmatpush2.msra.mxu0 0.0
  %2202 = vmatprep.subr.mxu0 0.0
  %2203 = vmatpush2.msra.mxu0 0.0
  %2204 = vmatprep.subr.mxu0 0.0
  %2205 = vmatpush2.msra.mxu0 0.0
  %2206 = vmatprep.subr.mxu0 0.0
  %2207 = vmatpush2.msra.mxu0 0.0
  %2208 = vmatprep.subr.mxu0 0.0
  %2209 = vmatpush2.msra.mxu0 0.0
  %2210 = vmatprep.subr.mxu0 0.0
  %2211 = vmatpush2.msra.mxu0 0.0
  %2212 = vmatprep.subr.mxu0 0.0
  %2213 = vmatpush2.msra.mxu0 0.0
  %2214 = vmatprep.subr.mxu0 0.0
  %2215 = vmatpush2.msra.mxu0 0.0
  %2216 = vmatprep.subr.mxu0 0.0
  %2217 = vmatpush2.msra.mxu0 0.0
  %2218 = vmatprep.subr.mxu0 0.0
  %2219 = vmatpush2.msra.mxu0 0.0
  %2220 = vmatprep.subr.mxu0 0.0
  %2221 = vmatpush2.msra.mxu0 0.0
  %2222 = vmatprep.subr.mxu0 0.0
  %2223 = vmatpush2.msra.mxu0 0.0
  %2224 = vmatprep.subr.mxu0 0.0
  %2225 = vmatpush2.msra.mxu0 0.0
  %2226 = vmatprep.subr.mxu0 0.0
  %2227 = vmatpush2.msra.mxu0 0.0
  %2228 = vmatprep.mubr.f32.mxu0 0.0
  %2229 = vmatmul.mubr.f32.gmra.mxu0 %v2162
  %v2230 = vpop.f32.mrf.mxu0
  %v2231 = vadd.f32 0.0, %v2230
  %v2232 = vpop.f32.mrf.mxu0
  %2233 = vdwg.mxu0
  %v2235 = vsel %vm65, %v774, 0
  %2237 = vmatprep.subr.mxu0 0.0
  %2238 = vmatpush1.msra.mxu0 0.0
  %2239 = vmatprep.subr.mxu0 0.0
  %2240 = vmatpush1.msra.mxu0 0.0
  %2241 = vmatprep.subr.mxu0 0.0
  %2242 = vmatpush1.msra.mxu0 0.0
  %2243 = vmatprep.subr.mxu0 0.0
  %2244 = vmatpush1.msra.mxu0 0.0
  %2245 = vmatprep.subr.mxu0 0.0
  %2246 = vmatpush1.msra.mxu0 0.0
  %2247 = vmatprep.subr.mxu0 0.0
  %2248 = vmatpush1.msra.mxu0 0.0
  %2249 = vmatprep.subr.mxu0 0.0
  %2250 = vmatpush1.msra.mxu0 0.0
  %2251 = vmatprep.subr.mxu0 0.0
  %2252 = vmatpush1.msra.mxu0 0.0
  %2253 = vmatprep.subr.mxu0 0.0
  %2254 = vmatpush1.msra.mxu0 0.0
  %2255 = vmatprep.subr.mxu0 0.0
  %2256 = vmatpush1.msra.mxu0 0.0
  %2257 = vmatprep.subr.mxu0 0.0
  %2258 = vmatpush1.msra.mxu0 0.0
  %2259 = vmatprep.subr.mxu0 0.0
  %2260 = vmatpush1.msra.mxu0 0.0
  %2261 = vmatprep.subr.mxu0 0.0
  %2262 = vmatpush1.msra.mxu0 %v780
  %2263 = vmatprep.subr.mxu0 0.0
  %2264 = vmatpush1.msra.mxu0 %v779
  %2265 = vmatprep.subr.mxu0 0.0
  %2266 = vmatpush1.msra.mxu0 %v778
  %2267 = vmatprep.subr.mxu0 0.0
  %2268 = vmatpush1.msra.mxu0 %v777
  %2269 = vmatprep.subr.mxu0 0.0
  %2270 = vmatpush2.msra.mxu0 0.0
  %2271 = vmatprep.subr.mxu0 0.0
  %2272 = vmatpush2.msra.mxu0 0.0
  %2273 = vmatprep.subr.mxu0 0.0
  %2274 = vmatpush2.msra.mxu0 0.0
  %2275 = vmatprep.subr.mxu0 0.0
  %2276 = vmatpush2.msra.mxu0 0.0
  %2277 = vmatprep.subr.mxu0 0.0
  %2278 = vmatpush2.msra.mxu0 0.0
  %2279 = vmatprep.subr.mxu0 0.0
  %2280 = vmatpush2.msra.mxu0 0.0
  %2281 = vmatprep.subr.mxu0 0.0
  %2282 = vmatpush2.msra.mxu0 0.0
  %2283 = vmatprep.subr.mxu0 0.0
  %2284 = vmatpush2.msra.mxu0 0.0
  %2285 = vmatprep.subr.mxu0 0.0
  %2286 = vmatpush2.msra.mxu0 0.0
  %2287 = vmatprep.subr.mxu0 0.0
  %2288 = vmatpush2.msra.mxu0 0.0
  %2289 = vmatprep.subr.mxu0 0.0
  %2290 = vmatpush2.msra.mxu0 0.0
  %2291 = vmatprep.subr.mxu0 0.0
  %2292 = vmatpush2.msra.mxu0 0.0
  %2293 = vmatprep.subr.mxu0 0.0
  %2294 = vmatpush2.msra.mxu0 0.0
  %2295 = vmatprep.subr.mxu0 0.0
  %2296 = vmatpush2.msra.mxu0 0.0
  %2297 = vmatprep.subr.mxu0 0.0
  %2298 = vmatpush2.msra.mxu0 0.0
  %2299 = vmatprep.subr.mxu0 0.0
  %2300 = vmatpush2.msra.mxu0 0.0
  %2301 = vmatprep.mubr.f32.mxu0 0.0
  %2302 = vmatmul.mubr.f32.gmra.mxu0 %v2235
  %v2303 = vpop.f32.mrf.mxu0
  %v2304 = vadd.f32 %v2231, %v2303
  %v2305 = vpop.f32.mrf.mxu0
  %2306 = vdwg.mxu0
  %v2307 = vadd.f32 %v2304, %v950
  %v2308 = vxor.u32 %v2307, 2147483648
  %v2309 = vmul.f32 %v2308, 1.442695
  %v2310 = vpow.pop %v2309
  %v2311 = vadd.f32 %v2310, 1.0
  %v2312 = vrcp.pop %v2311
  %v2313 = vmul.f32 1.0, %v2312
  %v2314 = vtanh.pop %v2307
  %2316 = vrot.lane.b32.xlu0 %v2160, 32
  %v2317 = vpop.permute.xlu0 %2316
  %v2319 = vmul.f32 %v2313, %v2317
  %2321 = vrot.lane.b32.xlu0 %v2314, 64
  %v2322 = vpop.permute.xlu0 %2321
  %v2324 = vmul.f32 %v2313, %v2322
  %2326 = vrot.lane.b32.xlu0 %v2324, 32
  %v2327 = vpop.permute.xlu0 %2326
  %v2329 = vadd.f32 %v2319, %v2327
  %v2330 = vtanh.pop %v2329
  %2332 = vrot.lane.b32.xlu0 %v2330, 64
  %v2333 = vpop.permute.xlu0 %2332
  %v2335 = vmul.f32 %v2313, %v2333
  %vm2336 = vcmp.gt.s32.totalorder %v64, 8
  %v2337 = vsel %vm2336, 1, 0
  %2338 = vset.pattern.permute.xlu0 0
  %2339 = vperm.xlu0 %2338, %v2337
  %v2340 = vpop.permute.xlu0 %2339
  %vm2341 = vcmp.eq.s32.totalorder %v2340, 1
  %2342 = vrot.lane.b32.xlu0 %v2151, 96
  %v2343 = vpop.permute.xlu0 %2342
  %v2345 = vsel %vm2341, %v2335, %v2343
  %v2346 = vld [vmem:[%s17] sm:$0xff]
  %v2347 = vld [vmem:[%s17 + $0x8] sm:$0xff]
  %v2348 = vld [vmem:[%s17 + $0x10] sm:$0xff]
  %v2349 = vld [vmem:[%s17 + $0x18] sm:$0xff]
  %v2350 = vld [vmem:[%s18] sm:$0x1]
  %v2352 = vlaneseq
  %v2353 = vshrl.u32 %v2352, 7
  %v2354 = vsub.s32 0, %v2353
  %v2355 = vrot.slane %v2350, %v2354
  %2358 = vrot.lane.b32.xlu0 %v2345, 32
  %v2359 = vpop.permute.xlu0 %2358
  %v2360 = vsel %vm65, %v2359, 0
  %2362 = vmatprep.subr.mxu0 0.0
  %2363 = vmatpush1.msra.mxu0 0.0
  %2364 = vmatprep.subr.mxu0 0.0
  %2365 = vmatpush1.msra.mxu0 0.0
  %2366 = vmatprep.subr.mxu0 0.0
  %2367 = vmatpush1.msra.mxu0 0.0
  %2368 = vmatprep.subr.mxu0 0.0
  %2369 = vmatpush1.msra.mxu0 0.0
  %2370 = vmatprep.subr.mxu0 0.0
  %2371 = vmatpush1.msra.mxu0 0.0
  %2372 = vmatprep.subr.mxu0 0.0
  %2373 = vmatpush1.msra.mxu0 0.0
  %2374 = vmatprep.subr.mxu0 0.0
  %2375 = vmatpush1.msra.mxu0 0.0
  %2376 = vmatprep.subr.mxu0 0.0
  %2377 = vmatpush1.msra.mxu0 0.0
  %2378 = vmatprep.subr.mxu0 0.0
  %2379 = vmatpush1.msra.mxu0 0.0
  %2380 = vmatprep.subr.mxu0 0.0
  %2381 = vmatpush1.msra.mxu0 0.0
  %2382 = vmatprep.subr.mxu0 0.0
  %2383 = vmatpush1.msra.mxu0 0.0
  %2384 = vmatprep.subr.mxu0 0.0
  %2385 = vmatpush1.msra.mxu0 0.0
  %2386 = vmatprep.subr.mxu0 0.0
  %2387 = vmatpush1.msra.mxu0 %v2349
  %2388 = vmatprep.subr.mxu0 0.0
  %2389 = vmatpush1.msra.mxu0 %v2348
  %2390 = vmatprep.subr.mxu0 0.0
  %2391 = vmatpush1.msra.mxu0 %v2347
  %2392 = vmatprep.subr.mxu0 0.0
  %2393 = vmatpush1.msra.mxu0 %v2346
  %2394 = vmatprep.subr.mxu0 0.0
  %2395 = vmatpush2.msra.mxu0 0.0
  %2396 = vmatprep.subr.mxu0 0.0
  %2397 = vmatpush2.msra.mxu0 0.0
  %2398 = vmatprep.subr.mxu0 0.0
  %2399 = vmatpush2.msra.mxu0 0.0
  %2400 = vmatprep.subr.mxu0 0.0
  %2401 = vmatpush2.msra.mxu0 0.0
  %2402 = vmatprep.subr.mxu0 0.0
  %2403 = vmatpush2.msra.mxu0 0.0
  %2404 = vmatprep.subr.mxu0 0.0
  %2405 = vmatpush2.msra.mxu0 0.0
  %2406 = vmatprep.subr.mxu0 0.0
  %2407 = vmatpush2.msra.mxu0 0.0
  %2408 = vmatprep.subr.mxu0 0.0
  %2409 = vmatpush2.msra.mxu0 0.0
  %2410 = vmatprep.subr.mxu0 0.0
  %2411 = vmatpush2.msra.mxu0 0.0
  %2412 = vmatprep.subr.mxu0 0.0
  %2413 = vmatpush2.msra.mxu0 0.0
  %2414 = vmatprep.subr.mxu0 0.0
  %2415 = vmatpush2.msra.mxu0 0.0
  %2416 = vmatprep.subr.mxu0 0.0
  %2417 = vmatpush2.msra.mxu0 0.0
  %2418 = vmatprep.subr.mxu0 0.0
  %2419 = vmatpush2.msra.mxu0 0.0
  %2420 = vmatprep.subr.mxu0 0.0
  %2421 = vmatpush2.msra.mxu0 0.0
  %2422 = vmatprep.subr.mxu0 0.0
  %2423 = vmatpush2.msra.mxu0 0.0
  %2424 = vmatprep.subr.mxu0 0.0
  %2425 = vmatpush2.msra.mxu0 0.0
  %2426 = vmatprep.mubr.f32.mxu0 0.0
  %2427 = vmatmul.mubr.f32.gmra.mxu0 %v2360
  %v2428 = vpop.f32.mrf.mxu0
  %v2429 = vadd.f32 %v2355, %v2428
  %v2430 = vpop.f32.mrf.mxu0
  %2431 = vdwg.mxu0
  %vm2433 = vcmask 254976
  %2434 = vst.msk [vmem:[%s19] sm:$0x3] %vm2433, %v94
  %2436 = vrot.lane.b32.xlu0 %v424, 32
  %v2437 = vpop.permute.xlu0 %2436
  %vm2439 = vcmask 517376
  %2440 = vst.msk [vmem:[%s19] sm:$0x3] %vm2439, %v2437
  %2441 = vrot.lane.b32.xlu0 %v2345, 96
  %v2442 = vpop.permute.xlu0 %2441
  %vm2444 = vcmask 779776
  %2445 = vst.msk [vmem:[%s19] sm:$0x3] %vm2444, %v2442
  %2447 = vrot.lane.b32.xlu0 %v2429, 96
  %v2448 = vpop.permute.xlu0 %2447
  %vm2450 = vcmask 845568
  %2451 = vst.msk [vmem:[%s19] sm:$0x3] %vm2450, %v2448
  %2453 = vrot.lane.b32.xlu0 %v329, 104
  %v2454 = vpop.permute.xlu0 %2453
  %vm2456 = vcmask 976704
  %2457 = vst.msk [vmem:[%s19] sm:$0x3] %vm2456, %v2454
  %vm2458 = vcmask 1042368
  %2459 = vst.msk [vmem:[%s19] sm:$0x3] %vm2458, 0.0
  // Predicated region
  $region78: #{model_forward.1} parent=0 // pred_check
    _
  $region79: #{model_forward.1} parent=0 // pred_check_branch
    %2461 = sbr.rel (0) target = $region81
  $region80: #{model_forward.1} parent=0 // pred_region
    _
  $region81: #{model_forward.1} parent=0 // pred_fallthru
    _
  // Predicated region
  $region82: #{model_forward.1} parent=0 // pred_check
    _
  $region83: #{model_forward.1} parent=0 // pred_check_branch
    %2463 = sbr.rel (0) target = $region85
  $region84: #{model_forward.1} parent=0 // pred_region
    _
  $region85: #{model_forward.1} parent=0 // pred_fallthru
    _

</llo_original>
